<compile_context>
chip_gen: v6e
topology: v6e:2x2x1
jax: 0.10.0
libtpu: 0.0.40
codegen_flags: <defaults>
</compile_context>

<pallas_src>
from functools import partial

import jax
import jax.numpy as jnp
from jax.experimental import pallas as pl
from jax.experimental.pallas import tpu as pltpu


def _round_up(x, m):
    return ((x + m - 1) // m) * m


def _make_deconv_kernel(*, n_blocks, KH, KW, Cin, Wpad, tile_m,
                        relu_factor, do_relu):
    """Kernel for one (co-tile, m-tile) grid step.

    Args (in pallas_call order):
      w_ref  : (KH, tile_co, KW*Cin) bf16  VMEM  (resident across inner M loop)
      b_ref  : (tile_co, 1)          f32   VMEM
      x_refs : n_blocks x (Cin, tile_m) bf16 VMEM  adjacent column blocks of x3
      o_ref  : (tile_co, tile_m)     VMEM  (lane-dense output slab)
      xw_ref : (Cin, n_blocks*tile_m) bf16 VMEM scratch (contiguous window)
      kt_ref : (KW*Cin, tile_m)      bf16 VMEM scratch (kw-grouped taps)
    """

    def kernel(w_ref, b_ref, *rest):
        x_refs = rest[:n_blocks]
        o_ref = rest[n_blocks]
        xw_ref = rest[n_blocks + 1]
        kt_ref = rest[n_blocks + 2]

        # Assemble the contiguous window of flattened padded-input columns
        # [i*tile_m, i*tile_m + n_blocks*tile_m) — aligned 128-lane stores.
        for d in range(n_blocks):
            xw_ref[:, d * tile_m:(d + 1) * tile_m] = x_refs[d][...]

        acc = jnp.zeros(o_ref.shape, jnp.float32)
        for kh in range(KH):
            # Pack the KW taps of this kernel row along the contraction dim so
            # the MXU matmul has K = KW*Cin (important when Cin is small).
            for kw in range(KW):
                off = kh * Wpad + kw          # static shift of the tap column
                kt_ref[kw * Cin:(kw + 1) * Cin, :] = xw_ref[:, off:off + tile_m]
            acc = acc + jnp.dot(w_ref[kh], kt_ref[...],
                                preferred_element_type=jnp.float32)

        # f32 epilogue: bias broadcast along lanes + LeakyReLU.
        out = acc + b_ref[...]
        if do_relu:
            if relu_factor == 0.0:
                out = jnp.maximum(out, 0.0)
            else:
                out = jnp.where(out >= 0, out, relu_factor * out)
        o_ref[...] = out.astype(o_ref.dtype)

    return kernel


def deconvolution2d_forward(x_nchw, weight_iohw, bias, *, stride=1,
                            relu_factor=0.0, do_relu=True, tile_m=None):
    """NCHW in / NCHW out, matching the PyTorch module (stride=1, 'valid')."""
    # TODO(synk): stride>1 would need zero-insertion (input dilation) before the
    # flattened-shift formulation; the module default stride=1 is implemented.
    assert stride == 1, "only stride=1 (module default) is implemented"
    # TODO(synk): norm_type in {'Ins','Batch'} not implemented (default None).

    N, Cin, H, W = x_nchw.shape
    _, Cout, KH, KW = weight_iohw.shape        # ConvTranspose2d weight: (Cin,Cout,KH,KW)
    OH, OW = H + KH - 1, W + KW - 1
    ph, pw = KH - 1, KW - 1
    Hpad, Wpad = H + 2 * ph, W + 2 * pw
    Mp = N * Hpad * Wpad                       # flattened padded output positions

    # ---- tile_m: 512 for large M, stepped down so the grid keeps >= 8 steps ----
    if tile_m is None:
        tile_m = 128
        for cand in (512, 256, 128):
            if pl.cdiv(Mp, cand) >= 8:
                tile_m = cand
                break
    m_tiles = pl.cdiv(Mp, tile_m)
    Mout = m_tiles * tile_m

    # Max static column shift of any tap; number of adjacent blocks that must be
    # visible per grid step so every tap slice fits in the VMEM window.
    max_off = (KH - 1) * Wpad + (KW - 1)
    n_blocks = 1 + pl.cdiv(max_off, tile_m)

    # ---- Cout padding / tiling (MXU rows; production configs get a co axis) ----
    Cout_pad = _round_up(Cout, 8)
    if Cout_pad > 128:
        Cout_pad = _round_up(Cout, 128)
        tile_co = 128
    else:
        tile_co = Cout_pad
    co_tiles = Cout_pad // tile_co

    # ---- bf16 padded, flattened input view (no HBM im2col) ----
    x_pad = jnp.pad(x_nchw.astype(jnp.bfloat16),
                    ((0, 0), (0, 0), (ph, ph), (pw, pw)))
    x3 = jnp.transpose(x_pad, (1, 0, 2, 3)).reshape(Cin, Mp)
    cols = (m_tiles + n_blocks - 1) * tile_m   # tail blocks (i+d) must be valid
    x3 = jnp.pad(x3, ((0, 0), (0, cols - Mp)))

    # ---- weights: flipped kernel, swapped channels, kw-grouped K layout ----
    # w_g[kh, co, kw*Cin + ci] = weight[ci, co, KH-1-kh, KW-1-kw]
    w_flip = weight_iohw[:, :, ::-1, ::-1]                       # (Cin, Cout, KH, KW)
    w_g = jnp.transpose(w_flip, (2, 1, 3, 0)).reshape(KH, Cout, KW * Cin)
    if Cout_pad != Cout:
        w_g = jnp.pad(w_g, ((0, 0), (0, Cout_pad - Cout), (0, 0)))
    w_g = w_g.astype(jnp.bfloat16)

    b = bias.reshape(Cout, 1).astype(jnp.float32)
    if Cout_pad != Cout:
        b = jnp.pad(b, ((0, Cout_pad - Cout), (0, 0)))

    kernel = _make_deconv_kernel(n_blocks=n_blocks, KH=KH, KW=KW, Cin=Cin,
                                 Wpad=Wpad, tile_m=tile_m,
                                 relu_factor=relu_factor, do_relu=do_relu)

    # n_blocks adjacent column-blocks of x3 per step (blocks i, i+1, ..).
    x_specs = [pl.BlockSpec((Cin, tile_m), (lambda j, i, d=d: (0, i + d)))
               for d in range(n_blocks)]

    out_dtype = x_nchw.dtype
    kdim = KH * KW * Cin
    cost = pl.CostEstimate(
        flops=2 * Mp * kdim * Cout,
        transcendentals=0,
        bytes_accessed=(x3.size * 2 * n_blocks + w_g.size * 2 * co_tiles
                        + b.size * 4
                        + Cout_pad * Mout * jnp.dtype(out_dtype).itemsize),
    )

    # VMEM budget: double-buffered inputs/output + scratch, clamped for v7x
    # (64 MiB physical -> leave headroom).  Weights/bias have a constant block
    # index across the inner M loop so they are only DMA'd once per co-tile.
    vmem_need = (2 * (w_g.size * 2 + b.size * 4)
                 + 2 * n_blocks * Cin * tile_m * 2
                 + 2 * tile_co * tile_m * 4
                 + n_blocks * Cin * tile_m * 2
                 + KW * Cin * tile_m * 2)
    vmem_limit = int(min(max(2 * vmem_need, 16 << 20), 48 << 20))

    out_flat = pl.pallas_call(
        kernel,
        out_shape=jax.ShapeDtypeStruct((Cout_pad, Mout), out_dtype),
        grid_spec=pltpu.PrefetchScalarGridSpec(
            num_scalar_prefetch=0,
            grid=(co_tiles, m_tiles),                 # m is the fast (inner) axis
            in_specs=[
                pl.BlockSpec((KH, tile_co, KW * Cin), lambda j, i: (0, j, 0)),
                pl.BlockSpec((tile_co, 1), lambda j, i: (j, 0)),
                *x_specs,
            ],
            out_specs=pl.BlockSpec((tile_co, tile_m), lambda j, i: (j, i)),
            scratch_shapes=[
                pltpu.VMEM((Cin, n_blocks * tile_m), jnp.bfloat16),
                pltpu.VMEM((KW * Cin, tile_m), jnp.bfloat16),
            ],
        ),
        compiler_params=pltpu.CompilerParams(
            dimension_semantics=("parallel", "parallel"),
            vmem_limit_bytes=vmem_limit,
        ),
        cost_estimate=cost,
    )(w_g, b, *([x3] * n_blocks))

    # (Cout_pad, Mout) -> (N, Cout, OH, OW): drop channel/column padding and the
    # invalid (padded-grid) spatial positions, then back to NCHW.
    out = out_flat[:Cout, :Mp].reshape(Cout, N, Hpad, Wpad)
    out = out[:, :, :OH, :OW]
    return jnp.transpose(out, (1, 0, 2, 3))


if __name__ == "__main__":
    # Small shapes consistent with the module: x is NCHW.
    N, Cin, H, W = 2, 4, 16, 16
    Cout, KH, KW, stride = 8, 7, 7, 1
    deviation = 0.01
    relu_factor = 0.0

    key = jax.random.PRNGKey(0)
    k_x, k_w, k_b = jax.random.split(key, 3)

    x = jax.random.normal(k_x, (N, Cin, H, W), jnp.float32)
    # nn.init.normal_(deconv.weight, std=deviation); ConvTranspose2d weight is (Cin,Cout,KH,KW)
    weight = deviation * jax.random.normal(k_w, (Cin, Cout, KH, KW), jnp.float32)
    # ConvTranspose2d default bias init: U(-1/sqrt(fan_in), 1/sqrt(fan_in)), fan_in=Cout*KH*KW
    bound = 1.0 / ((Cout * KH * KW) ** 0.5)
    bias = jax.random.uniform(k_b, (Cout,), jnp.float32, -bound, bound)

    out = deconvolution2d_forward(x, weight, bias, stride=stride,
                                  relu_factor=relu_factor, do_relu=True)
    out = jax.block_until_ready(out)

    OH, OW = H + KH - 1, W + KW - 1
    assert out.shape == (N, Cout, OH, OW)

    # Reference: ConvTranspose2d(stride=1, pad=0) == full-padded correlation with
    # the spatially-flipped kernel and swapped in/out channels.
    ref_w = jnp.transpose(weight[:, :, ::-1, ::-1], (1, 0, 2, 3))   # (Cout,Cin,KH,KW)
    ref = jax.lax.conv_general_dilated(
        x, ref_w, window_strides=(1, 1),
        padding=[(KH - 1, KH - 1), (KW - 1, KW - 1)],
        dimension_numbers=('NCHW', 'OIHW', 'NCHW'))
    ref = ref + bias.reshape(1, Cout, 1, 1)
    ref = jnp.where(ref >= 0, ref, relu_factor * ref)

    # bf16 MXU operands -> loosened tolerance (f32 accumulation keeps it tight).
    assert jnp.allclose(out, ref, atol=1e-2, rtol=1e-2), "mismatch vs reference conv_transpose"

    print("KERNEL_OK")
</pallas_src>

<mosaic_0001>
module attributes {stable_mosaic.version = 11 : i64} {
  func.func @kernel(%arg0: i32, %arg1: i32, %arg2: memref<7x8x28xbf16, #tpu.memory_space<vmem>>, %arg3: memref<8x1xf32, #tpu.memory_space<vmem>>, %arg4: memref<4x128xbf16, #tpu.memory_space<vmem>>, %arg5: memref<4x128xbf16, #tpu.memory_space<vmem>>, %arg6: memref<4x128xbf16, #tpu.memory_space<vmem>>, %arg7: memref<8x128xf32, #tpu.memory_space<vmem>>, %arg8: memref<4x384xbf16, #tpu.memory_space<vmem>>, %arg9: memref<28x128xbf16, #tpu.memory_space<vmem>>) attributes {dimension_semantics = [#tpu.dimension_semantics<parallel>, #tpu.dimension_semantics<parallel>], iteration_bounds = array<i64: 1, 13>, scalar_prefetch = 0 : i64, scratch_operands = 2 : i64, tpu.core_type = #tpu.core_type<tc>, window_params = [{transform_indices = @transform_0, window_bounds = array<i64: 7, 8, 28>}, {transform_indices = @transform_1, window_bounds = array<i64: 8, 1>}, {transform_indices = @transform_2, window_bounds = array<i64: 4, 128>}, {transform_indices = @transform_3, window_bounds = array<i64: 4, 128>}, {transform_indices = @transform_4, window_bounds = array<i64: 4, 128>}, {transform_indices = @transform_5, window_bounds = array<i64: 8, 128>}]} {
    %c0 = arith.constant 0 : index
    %c0_0 = arith.constant 0 : index
    %0 = vector.load %arg4[%c0, %c0_0] : memref<4x128xbf16, #tpu.memory_space<vmem>>, vector<4x128xbf16>
    %c0_1 = arith.constant 0 : index
    %c0_2 = arith.constant 0 : index
    %1 = vector.load %arg8[%c0_1, %c0_2] : memref<4x384xbf16, #tpu.memory_space<vmem>>, vector<4x128xbf16>
    tpu.vector_store %arg8[%c0_1, %c0_2], %0 {strides = array<i32>} : memref<4x384xbf16, #tpu.memory_space<vmem>>, vector<4x128xbf16>,
    %c0_3 = arith.constant 0 : index
    %c0_4 = arith.constant 0 : index
    %2 = vector.load %arg5[%c0_3, %c0_4] : memref<4x128xbf16, #tpu.memory_space<vmem>>, vector<4x128xbf16>
    %c0_5 = arith.constant 0 : index
    %c128 = arith.constant 128 : index
    %3 = vector.load %arg8[%c0_5, %c128] : memref<4x384xbf16, #tpu.memory_space<vmem>>, vector<4x128xbf16>
    tpu.vector_store %arg8[%c0_5, %c128], %2 {strides = array<i32>} : memref<4x384xbf16, #tpu.memory_space<vmem>>, vector<4x128xbf16>,
    %c0_6 = arith.constant 0 : index
    %c0_7 = arith.constant 0 : index
    %4 = vector.load %arg6[%c0_6, %c0_7] : memref<4x128xbf16, #tpu.memory_space<vmem>>, vector<4x128xbf16>
    %c0_8 = arith.constant 0 : index
    %c256 = arith.constant 256 : index
    %5 = vector.load %arg8[%c0_8, %c256] : memref<4x384xbf16, #tpu.memory_space<vmem>>, vector<4x128xbf16>
    tpu.vector_store %arg8[%c0_8, %c256], %4 {strides = array<i32>} : memref<4x384xbf16, #tpu.memory_space<vmem>>, vector<4x128xbf16>,
    %cst = arith.constant 0.000000e+00 : f32
    %6 = vector.broadcast %cst : f32 to vector<8x128xf32>
    %c0_9 = arith.constant 0 : index
    %c0_10 = arith.constant 0 : index
    %7 = vector.load %arg8[%c0_9, %c0_10] : memref<4x384xbf16, #tpu.memory_space<vmem>>, vector<4x128xbf16>
    %c0_11 = arith.constant 0 : index
    %c0_12 = arith.constant 0 : index
    %8 = vector.load %arg9[%c0_11, %c0_12] : memref<28x128xbf16, #tpu.memory_space<vmem>>, vector<4x128xbf16>
    tpu.vector_store %arg9[%c0_11, %c0_12], %7 {strides = array<i32>} : memref<28x128xbf16, #tpu.memory_space<vmem>>, vector<4x128xbf16>,
    %c0_13 = arith.constant 0 : index
    %c1 = arith.constant 1 : index
    %9 = vector.load %arg8[%c0_13, %c1] : memref<4x384xbf16, #tpu.memory_space<vmem>>, vector<4x128xbf16>
    %c4 = arith.constant 4 : index
    %c0_14 = arith.constant 0 : index
    %10 = vector.load %arg9[%c4, %c0_14] : memref<28x128xbf16, #tpu.memory_space<vmem>>, vector<4x128xbf16>
    tpu.vector_store %arg9[%c4, %c0_14], %9 {strides = array<i32>} : memref<28x128xbf16, #tpu.memory_space<vmem>>, vector<4x128xbf16>,
    %c0_15 = arith.constant 0 : index
    %c2 = arith.constant 2 : index
    %11 = vector.load %arg8[%c0_15, %c2] : memref<4x384xbf16, #tpu.memory_space<vmem>>, vector<4x128xbf16>
    %c8 = arith.constant 8 : index
    %c0_16 = arith.constant 0 : index
    %12 = vector.load %arg9[%c8, %c0_16] : memref<28x128xbf16, #tpu.memory_space<vmem>>, vector<4x128xbf16>
    tpu.vector_store %arg9[%c8, %c0_16], %11 {strides = array<i32>} : memref<28x128xbf16, #tpu.memory_space<vmem>>, vector<4x128xbf16>,
    %c0_17 = arith.constant 0 : index
    %c3 = arith.constant 3 : index
    %13 = vector.load %arg8[%c0_17, %c3] : memref<4x384xbf16, #tpu.memory_space<vmem>>, vector<4x128xbf16>
    %c12 = arith.constant 12 : index
    %c0_18 = arith.constant 0 : index
    %14 = vector.load %arg9[%c12, %c0_18] : memref<28x128xbf16, #tpu.memory_space<vmem>>, vector<4x128xbf16>
    tpu.vector_store %arg9[%c12, %c0_18], %13 {strides = array<i32>} : memref<28x128xbf16, #tpu.memory_space<vmem>>, vector<4x128xbf16>,
    %c0_19 = arith.constant 0 : index
    %c4_20 = arith.constant 4 : index
    %15 = vector.load %arg8[%c0_19, %c4_20] : memref<4x384xbf16, #tpu.memory_space<vmem>>, vector<4x128xbf16>
    %c16 = arith.constant 16 : index
    %c0_21 = arith.constant 0 : index
    %16 = vector.load %arg9[%c16, %c0_21] : memref<28x128xbf16, #tpu.memory_space<vmem>>, vector<4x128xbf16>
    tpu.vector_store %arg9[%c16, %c0_21], %15 {strides = array<i32>} : memref<28x128xbf16, #tpu.memory_space<vmem>>, vector<4x128xbf16>,
    %c0_22 = arith.constant 0 : index
    %c5 = arith.constant 5 : index
    %17 = vector.load %arg8[%c0_22, %c5] : memref<4x384xbf16, #tpu.memory_space<vmem>>, vector<4x128xbf16>
    %c20 = arith.constant 20 : index
    %c0_23 = arith.constant 0 : index
    %18 = vector.load %arg9[%c20, %c0_23] : memref<28x128xbf16, #tpu.memory_space<vmem>>, vector<4x128xbf16>
    tpu.vector_store %arg9[%c20, %c0_23], %17 {strides = array<i32>} : memref<28x128xbf16, #tpu.memory_space<vmem>>, vector<4x128xbf16>,
    %c0_24 = arith.constant 0 : index
    %c6 = arith.constant 6 : index
    %19 = vector.load %arg8[%c0_24, %c6] : memref<4x384xbf16, #tpu.memory_space<vmem>>, vector<4x128xbf16>
    %c24 = arith.constant 24 : index
    %c0_25 = arith.constant 0 : index
    %20 = vector.load %arg9[%c24, %c0_25] : memref<28x128xbf16, #tpu.memory_space<vmem>>, vector<4x128xbf16>
    tpu.vector_store %arg9[%c24, %c0_25], %19 {strides = array<i32>} : memref<28x128xbf16, #tpu.memory_space<vmem>>, vector<4x128xbf16>,
    %c0_26 = arith.constant 0 : index
    %c0_27 = arith.constant 0 : index
    %c0_28 = arith.constant 0 : index
    %21 = vector.load %arg2[%c0_26, %c0_27, %c0_28] : memref<7x8x28xbf16, #tpu.memory_space<vmem>>, vector<1x8x28xbf16>
    %22 = vector.shape_cast %21 : vector<1x8x28xbf16> to vector<8x28xbf16>
    %c0_29 = arith.constant 0 : index
    %c0_30 = arith.constant 0 : index
    %23 = vector.load %arg9[%c0_29, %c0_30] : memref<28x128xbf16, #tpu.memory_space<vmem>>, vector<28x128xbf16>
    %cst_31 = arith.constant dense<0.000000e+00> : vector<8x128xf32>
    %24 = tpu.matmul %22, %23, %cst_31 {dimension_numbers = #tpu.dot_dimension_numbers<[1], [0], [0], [1], [0, 0, 1, 1], [], []>} : vector<8x28xbf16>, vector<28x128xbf16>, vector<8x128xf32> -> vector<8x128xf32>
    %25 = arith.addf %6, %24 : vector<8x128xf32>
    %c0_32 = arith.constant 0 : index
    %c28 = arith.constant 28 : index
    %26 = vector.load %arg8[%c0_32, %c28] : memref<4x384xbf16, #tpu.memory_space<vmem>>, vector<4x128xbf16>
    %c0_33 = arith.constant 0 : index
    %c0_34 = arith.constant 0 : index
    %27 = vector.load %arg9[%c0_33, %c0_34] : memref<28x128xbf16, #tpu.memory_space<vmem>>, vector<4x128xbf16>
    tpu.vector_store %arg9[%c0_33, %c0_34], %26 {strides = array<i32>} : memref<28x128xbf16, #tpu.memory_space<vmem>>, vector<4x128xbf16>,
    %c0_35 = arith.constant 0 : index
    %c29 = arith.constant 29 : index
    %28 = vector.load %arg8[%c0_35, %c29] : memref<4x384xbf16, #tpu.memory_space<vmem>>, vector<4x128xbf16>
    %c4_36 = arith.constant 4 : index
    %c0_37 = arith.constant 0 : index
    %29 = vector.load %arg9[%c4_36, %c0_37] : memref<28x128xbf16, #tpu.memory_space<vmem>>, vector<4x128xbf16>
    tpu.vector_store %arg9[%c4_36, %c0_37], %28 {strides = array<i32>} : memref<28x128xbf16, #tpu.memory_space<vmem>>, vector<4x128xbf16>,
    %c0_38 = arith.constant 0 : index
    %c30 = arith.constant 30 : index
    %30 = vector.load %arg8[%c0_38, %c30] : memref<4x384xbf16, #tpu.memory_space<vmem>>, vector<4x128xbf16>
    %c8_39 = arith.constant 8 : index
    %c0_40 = arith.constant 0 : index
    %31 = vector.load %arg9[%c8_39, %c0_40] : memref<28x128xbf16, #tpu.memory_space<vmem>>, vector<4x128xbf16>
    tpu.vector_store %arg9[%c8_39, %c0_40], %30 {strides = array<i32>} : memref<28x128xbf16, #tpu.memory_space<vmem>>, vector<4x128xbf16>,
    %c0_41 = arith.constant 0 : index
    %c31 = arith.constant 31 : index
    %32 = vector.load %arg8[%c0_41, %c31] : memref<4x384xbf16, #tpu.memory_space<vmem>>, vector<4x128xbf16>
    %c12_42 = arith.constant 12 : index
    %c0_43 = arith.constant 0 : index
    %33 = vector.load %arg9[%c12_42, %c0_43] : memref<28x128xbf16, #tpu.memory_space<vmem>>, vector<4x128xbf16>
    tpu.vector_store %arg9[%c12_42, %c0_43], %32 {strides = array<i32>} : memref<28x128xbf16, #tpu.memory_space<vmem>>, vector<4x128xbf16>,
    %c0_44 = arith.constant 0 : index
    %c32 = arith.constant 32 : index
    %34 = vector.load %arg8[%c0_44, %c32] : memref<4x384xbf16, #tpu.memory_space<vmem>>, vector<4x128xbf16>
    %c16_45 = arith.constant 16 : index
    %c0_46 = arith.constant 0 : index
    %35 = vector.load %arg9[%c16_45, %c0_46] : memref<28x128xbf16, #tpu.memory_space<vmem>>, vector<4x128xbf16>
    tpu.vector_store %arg9[%c16_45, %c0_46], %34 {strides = array<i32>} : memref<28x128xbf16, #tpu.memory_space<vmem>>, vector<4x128xbf16>,
    %c0_47 = arith.constant 0 : index
    %c33 = arith.constant 33 : index
    %36 = vector.load %arg8[%c0_47, %c33] : memref<4x384xbf16, #tpu.memory_space<vmem>>, vector<4x128xbf16>
    %c20_48 = arith.constant 20 : index
    %c0_49 = arith.constant 0 : index
    %37 = vector.load %arg9[%c20_48, %c0_49] : memref<28x128xbf16, #tpu.memory_space<vmem>>, vector<4x128xbf16>
    tpu.vector_store %arg9[%c20_48, %c0_49], %36 {strides = array<i32>} : memref<28x128xbf16, #tpu.memory_space<vmem>>, vector<4x128xbf16>,
    %c0_50 = arith.constant 0 : index
    %c34 = arith.constant 34 : index
    %38 = vector.load %arg8[%c0_50, %c34] : memref<4x384xbf16, #tpu.memory_space<vmem>>, vector<4x128xbf16>
    %c24_51 = arith.constant 24 : index
    %c0_52 = arith.constant 0 : index
    %39 = vector.load %arg9[%c24_51, %c0_52] : memref<28x128xbf16, #tpu.memory_space<vmem>>, vector<4x128xbf16>
    tpu.vector_store %arg9[%c24_51, %c0_52], %38 {strides = array<i32>} : memref<28x128xbf16, #tpu.memory_space<vmem>>, vector<4x128xbf16>,
    %c1_53 = arith.constant 1 : index
    %c0_54 = arith.constant 0 : index
    %c0_55 = arith.constant 0 : index
    %40 = vector.load %arg2[%c1_53, %c0_54, %c0_55] : memref<7x8x28xbf16, #tpu.memory_space<vmem>>, vector<1x8x28xbf16>
    %41 = vector.shape_cast %40 : vector<1x8x28xbf16> to vector<8x28xbf16>
    %c0_56 = arith.constant 0 : index
    %c0_57 = arith.constant 0 : index
    %42 = vector.load %arg9[%c0_56, %c0_57] : memref<28x128xbf16, #tpu.memory_space<vmem>>, vector<28x128xbf16>
    %cst_58 = arith.constant dense<0.000000e+00> : vector<8x128xf32>
    %43 = tpu.matmul %41, %42, %cst_58 {dimension_numbers = #tpu.dot_dimension_numbers<[1], [0], [0], [1], [0, 0, 1, 1], [], []>} : vector<8x28xbf16>, vector<28x128xbf16>, vector<8x128xf32> -> vector<8x128xf32>
    %44 = arith.addf %25, %43 : vector<8x128xf32>
    %c0_59 = arith.constant 0 : index
    %c56 = arith.constant 56 : index
    %45 = vector.load %arg8[%c0_59, %c56] : memref<4x384xbf16, #tpu.memory_space<vmem>>, vector<4x128xbf16>
    %c0_60 = arith.constant 0 : index
    %c0_61 = arith.constant 0 : index
    %46 = vector.load %arg9[%c0_60, %c0_61] : memref<28x128xbf16, #tpu.memory_space<vmem>>, vector<4x128xbf16>
    tpu.vector_store %arg9[%c0_60, %c0_61], %45 {strides = array<i32>} : memref<28x128xbf16, #tpu.memory_space<vmem>>, vector<4x128xbf16>,
    %c0_62 = arith.constant 0 : index
    %c57 = arith.constant 57 : index
    %47 = vector.load %arg8[%c0_62, %c57] : memref<4x384xbf16, #tpu.memory_space<vmem>>, vector<4x128xbf16>
    %c4_63 = arith.constant 4 : index
    %c0_64 = arith.constant 0 : index
    %48 = vector.load %arg9[%c4_63, %c0_64] : memref<28x128xbf16, #tpu.memory_space<vmem>>, vector<4x128xbf16>
    tpu.vector_store %arg9[%c4_63, %c0_64], %47 {strides = array<i32>} : memref<28x128xbf16, #tpu.memory_space<vmem>>, vector<4x128xbf16>,
    %c0_65 = arith.constant 0 : index
    %c58 = arith.constant 58 : index
    %49 = vector.load %arg8[%c0_65, %c58] : memref<4x384xbf16, #tpu.memory_space<vmem>>, vector<4x128xbf16>
    %c8_66 = arith.constant 8 : index
    %c0_67 = arith.constant 0 : index
    %50 = vector.load %arg9[%c8_66, %c0_67] : memref<28x128xbf16, #tpu.memory_space<vmem>>, vector<4x128xbf16>
    tpu.vector_store %arg9[%c8_66, %c0_67], %49 {strides = array<i32>} : memref<28x128xbf16, #tpu.memory_space<vmem>>, vector<4x128xbf16>,
    %c0_68 = arith.constant 0 : index
    %c59 = arith.constant 59 : index
    %51 = vector.load %arg8[%c0_68, %c59] : memref<4x384xbf16, #tpu.memory_space<vmem>>, vector<4x128xbf16>
    %c12_69 = arith.constant 12 : index
    %c0_70 = arith.constant 0 : index
    %52 = vector.load %arg9[%c12_69, %c0_70] : memref<28x128xbf16, #tpu.memory_space<vmem>>, vector<4x128xbf16>
    tpu.vector_store %arg9[%c12_69, %c0_70], %51 {strides = array<i32>} : memref<28x128xbf16, #tpu.memory_space<vmem>>, vector<4x128xbf16>,
    %c0_71 = arith.constant 0 : index
    %c60 = arith.constant 60 : index
    %53 = vector.load %arg8[%c0_71, %c60] : memref<4x384xbf16, #tpu.memory_space<vmem>>, vector<4x128xbf16>
    %c16_72 = arith.constant 16 : index
    %c0_73 = arith.constant 0 : index
    %54 = vector.load %arg9[%c16_72, %c0_73] : memref<28x128xbf16, #tpu.memory_space<vmem>>, vector<4x128xbf16>
    tpu.vector_store %arg9[%c16_72, %c0_73], %53 {strides = array<i32>} : memref<28x128xbf16, #tpu.memory_space<vmem>>, vector<4x128xbf16>,
    %c0_74 = arith.constant 0 : index
    %c61 = arith.constant 61 : index
    %55 = vector.load %arg8[%c0_74, %c61] : memref<4x384xbf16, #tpu.memory_space<vmem>>, vector<4x128xbf16>
    %c20_75 = arith.constant 20 : index
    %c0_76 = arith.constant 0 : index
    %56 = vector.load %arg9[%c20_75, %c0_76] : memref<28x128xbf16, #tpu.memory_space<vmem>>, vector<4x128xbf16>
    tpu.vector_store %arg9[%c20_75, %c0_76], %55 {strides = array<i32>} : memref<28x128xbf16, #tpu.memory_space<vmem>>, vector<4x128xbf16>,
    %c0_77 = arith.constant 0 : index
    %c62 = arith.constant 62 : index
    %57 = vector.load %arg8[%c0_77, %c62] : memref<4x384xbf16, #tpu.memory_space<vmem>>, vector<4x128xbf16>
    %c24_78 = arith.constant 24 : index
    %c0_79 = arith.constant 0 : index
    %58 = vector.load %arg9[%c24_78, %c0_79] : memref<28x128xbf16, #tpu.memory_space<vmem>>, vector<4x128xbf16>
    tpu.vector_store %arg9[%c24_78, %c0_79], %57 {strides = array<i32>} : memref<28x128xbf16, #tpu.memory_space<vmem>>, vector<4x128xbf16>,
    %c2_80 = arith.constant 2 : index
    %c0_81 = arith.constant 0 : index
    %c0_82 = arith.constant 0 : index
    %59 = vector.load %arg2[%c2_80, %c0_81, %c0_82] : memref<7x8x28xbf16, #tpu.memory_space<vmem>>, vector<1x8x28xbf16>
    %60 = vector.shape_cast %59 : vector<1x8x28xbf16> to vector<8x28xbf16>
    %c0_83 = arith.constant 0 : index
    %c0_84 = arith.constant 0 : index
    %61 = vector.load %arg9[%c0_83, %c0_84] : memref<28x128xbf16, #tpu.memory_space<vmem>>, vector<28x128xbf16>
    %cst_85 = arith.constant dense<0.000000e+00> : vector<8x128xf32>
    %62 = tpu.matmul %60, %61, %cst_85 {dimension_numbers = #tpu.dot_dimension_numbers<[1], [0], [0], [1], [0, 0, 1, 1], [], []>} : vector<8x28xbf16>, vector<28x128xbf16>, vector<8x128xf32> -> vector<8x128xf32>
    %63 = arith.addf %44, %62 : vector<8x128xf32>
    %c0_86 = arith.constant 0 : index
    %c84 = arith.constant 84 : index
    %64 = vector.load %arg8[%c0_86, %c84] : memref<4x384xbf16, #tpu.memory_space<vmem>>, vector<4x128xbf16>
    %c0_87 = arith.constant 0 : index
    %c0_88 = arith.constant 0 : index
    %65 = vector.load %arg9[%c0_87, %c0_88] : memref<28x128xbf16, #tpu.memory_space<vmem>>, vector<4x128xbf16>
    tpu.vector_store %arg9[%c0_87, %c0_88], %64 {strides = array<i32>} : memref<28x128xbf16, #tpu.memory_space<vmem>>, vector<4x128xbf16>,
    %c0_89 = arith.constant 0 : index
    %c85 = arith.constant 85 : index
    %66 = vector.load %arg8[%c0_89, %c85] : memref<4x384xbf16, #tpu.memory_space<vmem>>, vector<4x128xbf16>
    %c4_90 = arith.constant 4 : index
    %c0_91 = arith.constant 0 : index
    %67 = vector.load %arg9[%c4_90, %c0_91] : memref<28x128xbf16, #tpu.memory_space<vmem>>, vector<4x128xbf16>
    tpu.vector_store %arg9[%c4_90, %c0_91], %66 {strides = array<i32>} : memref<28x128xbf16, #tpu.memory_space<vmem>>, vector<4x128xbf16>,
    %c0_92 = arith.constant 0 : index
    %c86 = arith.constant 86 : index
    %68 = vector.load %arg8[%c0_92, %c86] : memref<4x384xbf16, #tpu.memory_space<vmem>>, vector<4x128xbf16>
    %c8_93 = arith.constant 8 : index
    %c0_94 = arith.constant 0 : index
    %69 = vector.load %arg9[%c8_93, %c0_94] : memref<28x128xbf16, #tpu.memory_space<vmem>>, vector<4x128xbf16>
    tpu.vector_store %arg9[%c8_93, %c0_94], %68 {strides = array<i32>} : memref<28x128xbf16, #tpu.memory_space<vmem>>, vector<4x128xbf16>,
    %c0_95 = arith.constant 0 : index
    %c87 = arith.constant 87 : index
    %70 = vector.load %arg8[%c0_95, %c87] : memref<4x384xbf16, #tpu.memory_space<vmem>>, vector<4x128xbf16>
    %c12_96 = arith.constant 12 : index
    %c0_97 = arith.constant 0 : index
    %71 = vector.load %arg9[%c12_96, %c0_97] : memref<28x128xbf16, #tpu.memory_space<vmem>>, vector<4x128xbf16>
    tpu.vector_store %arg9[%c12_96, %c0_97], %70 {strides = array<i32>} : memref<28x128xbf16, #tpu.memory_space<vmem>>, vector<4x128xbf16>,
    %c0_98 = arith.constant 0 : index
    %c88 = arith.constant 88 : index
    %72 = vector.load %arg8[%c0_98, %c88] : memref<4x384xbf16, #tpu.memory_space<vmem>>, vector<4x128xbf16>
    %c16_99 = arith.constant 16 : index
    %c0_100 = arith.constant 0 : index
    %73 = vector.load %arg9[%c16_99, %c0_100] : memref<28x128xbf16, #tpu.memory_space<vmem>>, vector<4x128xbf16>
    tpu.vector_store %arg9[%c16_99, %c0_100], %72 {strides = array<i32>} : memref<28x128xbf16, #tpu.memory_space<vmem>>, vector<4x128xbf16>,
    %c0_101 = arith.constant 0 : index
    %c89 = arith.constant 89 : index
    %74 = vector.load %arg8[%c0_101, %c89] : memref<4x384xbf16, #tpu.memory_space<vmem>>, vector<4x128xbf16>
    %c20_102 = arith.constant 20 : index
    %c0_103 = arith.constant 0 : index
    %75 = vector.load %arg9[%c20_102, %c0_103] : memref<28x128xbf16, #tpu.memory_space<vmem>>, vector<4x128xbf16>
    tpu.vector_store %arg9[%c20_102, %c0_103], %74 {strides = array<i32>} : memref<28x128xbf16, #tpu.memory_space<vmem>>, vector<4x128xbf16>,
    %c0_104 = arith.constant 0 : index
    %c90 = arith.constant 90 : index
    %76 = vector.load %arg8[%c0_104, %c90] : memref<4x384xbf16, #tpu.memory_space<vmem>>, vector<4x128xbf16>
    %c24_105 = arith.constant 24 : index
    %c0_106 = arith.constant 0 : index
    %77 = vector.load %arg9[%c24_105, %c0_106] : memref<28x128xbf16, #tpu.memory_space<vmem>>, vector<4x128xbf16>
    tpu.vector_store %arg9[%c24_105, %c0_106], %76 {strides = array<i32>} : memref<28x128xbf16, #tpu.memory_space<vmem>>, vector<4x128xbf16>,
    %c3_107 = arith.constant 3 : index
    %c0_108 = arith.constant 0 : index
    %c0_109 = arith.constant 0 : index
    %78 = vector.load %arg2[%c3_107, %c0_108, %c0_109] : memref<7x8x28xbf16, #tpu.memory_space<vmem>>, vector<1x8x28xbf16>
    %79 = vector.shape_cast %78 : vector<1x8x28xbf16> to vector<8x28xbf16>
    %c0_110 = arith.constant 0 : index
    %c0_111 = arith.constant 0 : index
    %80 = vector.load %arg9[%c0_110, %c0_111] : memref<28x128xbf16, #tpu.memory_space<vmem>>, vector<28x128xbf16>
    %cst_112 = arith.constant dense<0.000000e+00> : vector<8x128xf32>
    %81 = tpu.matmul %79, %80, %cst_112 {dimension_numbers = #tpu.dot_dimension_numbers<[1], [0], [0], [1], [0, 0, 1, 1], [], []>} : vector<8x28xbf16>, vector<28x128xbf16>, vector<8x128xf32> -> vector<8x128xf32>
    %82 = arith.addf %63, %81 : vector<8x128xf32>
    %c0_113 = arith.constant 0 : index
    %c112 = arith.constant 112 : index
    %83 = vector.load %arg8[%c0_113, %c112] : memref<4x384xbf16, #tpu.memory_space<vmem>>, vector<4x128xbf16>
    %c0_114 = arith.constant 0 : index
    %c0_115 = arith.constant 0 : index
    %84 = vector.load %arg9[%c0_114, %c0_115] : memref<28x128xbf16, #tpu.memory_space<vmem>>, vector<4x128xbf16>
    tpu.vector_store %arg9[%c0_114, %c0_115], %83 {strides = array<i32>} : memref<28x128xbf16, #tpu.memory_space<vmem>>, vector<4x128xbf16>,
    %c0_116 = arith.constant 0 : index
    %c113 = arith.constant 113 : index
    %85 = vector.load %arg8[%c0_116, %c113] : memref<4x384xbf16, #tpu.memory_space<vmem>>, vector<4x128xbf16>
    %c4_117 = arith.constant 4 : index
    %c0_118 = arith.constant 0 : index
    %86 = vector.load %arg9[%c4_117, %c0_118] : memref<28x128xbf16, #tpu.memory_space<vmem>>, vector<4x128xbf16>
    tpu.vector_store %arg9[%c4_117, %c0_118], %85 {strides = array<i32>} : memref<28x128xbf16, #tpu.memory_space<vmem>>, vector<4x128xbf16>,
    %c0_119 = arith.constant 0 : index
    %c114 = arith.constant 114 : index
    %87 = vector.load %arg8[%c0_119, %c114] : memref<4x384xbf16, #tpu.memory_space<vmem>>, vector<4x128xbf16>
    %c8_120 = arith.constant 8 : index
    %c0_121 = arith.constant 0 : index
    %88 = vector.load %arg9[%c8_120, %c0_121] : memref<28x128xbf16, #tpu.memory_space<vmem>>, vector<4x128xbf16>
    tpu.vector_store %arg9[%c8_120, %c0_121], %87 {strides = array<i32>} : memref<28x128xbf16, #tpu.memory_space<vmem>>, vector<4x128xbf16>,
    %c0_122 = arith.constant 0 : index
    %c115 = arith.constant 115 : index
    %89 = vector.load %arg8[%c0_122, %c115] : memref<4x384xbf16, #tpu.memory_space<vmem>>, vector<4x128xbf16>
    %c12_123 = arith.constant 12 : index
    %c0_124 = arith.constant 0 : index
    %90 = vector.load %arg9[%c12_123, %c0_124] : memref<28x128xbf16, #tpu.memory_space<vmem>>, vector<4x128xbf16>
    tpu.vector_store %arg9[%c12_123, %c0_124], %89 {strides = array<i32>} : memref<28x128xbf16, #tpu.memory_space<vmem>>, vector<4x128xbf16>,
    %c0_125 = arith.constant 0 : index
    %c116 = arith.constant 116 : index
    %91 = vector.load %arg8[%c0_125, %c116] : memref<4x384xbf16, #tpu.memory_space<vmem>>, vector<4x128xbf16>
    %c16_126 = arith.constant 16 : index
    %c0_127 = arith.constant 0 : index
    %92 = vector.load %arg9[%c16_126, %c0_127] : memref<28x128xbf16, #tpu.memory_space<vmem>>, vector<4x128xbf16>
    tpu.vector_store %arg9[%c16_126, %c0_127], %91 {strides = array<i32>} : memref<28x128xbf16, #tpu.memory_space<vmem>>, vector<4x128xbf16>,
    %c0_128 = arith.constant 0 : index
    %c117 = arith.constant 117 : index
    %93 = vector.load %arg8[%c0_128, %c117] : memref<4x384xbf16, #tpu.memory_space<vmem>>, vector<4x128xbf16>
    %c20_129 = arith.constant 20 : index
    %c0_130 = arith.constant 0 : index
    %94 = vector.load %arg9[%c20_129, %c0_130] : memref<28x128xbf16, #tpu.memory_space<vmem>>, vector<4x128xbf16>
    tpu.vector_store %arg9[%c20_129, %c0_130], %93 {strides = array<i32>} : memref<28x128xbf16, #tpu.memory_space<vmem>>, vector<4x128xbf16>,
    %c0_131 = arith.constant 0 : index
    %c118 = arith.constant 118 : index
    %95 = vector.load %arg8[%c0_131, %c118] : memref<4x384xbf16, #tpu.memory_space<vmem>>, vector<4x128xbf16>
    %c24_132 = arith.constant 24 : index
    %c0_133 = arith.constant 0 : index
    %96 = vector.load %arg9[%c24_132, %c0_133] : memref<28x128xbf16, #tpu.memory_space<vmem>>, vector<4x128xbf16>
    tpu.vector_store %arg9[%c24_132, %c0_133], %95 {strides = array<i32>} : memref<28x128xbf16, #tpu.memory_space<vmem>>, vector<4x128xbf16>,
    %c4_134 = arith.constant 4 : index
    %c0_135 = arith.constant 0 : index
    %c0_136 = arith.constant 0 : index
    %97 = vector.load %arg2[%c4_134, %c0_135, %c0_136] : memref<7x8x28xbf16, #tpu.memory_space<vmem>>, vector<1x8x28xbf16>
    %98 = vector.shape_cast %97 : vector<1x8x28xbf16> to vector<8x28xbf16>
    %c0_137 = arith.constant 0 : index
    %c0_138 = arith.constant 0 : index
    %99 = vector.load %arg9[%c0_137, %c0_138] : memref<28x128xbf16, #tpu.memory_space<vmem>>, vector<28x128xbf16>
    %cst_139 = arith.constant dense<0.000000e+00> : vector<8x128xf32>
    %100 = tpu.matmul %98, %99, %cst_139 {dimension_numbers = #tpu.dot_dimension_numbers<[1], [0], [0], [1], [0, 0, 1, 1], [], []>} : vector<8x28xbf16>, vector<28x128xbf16>, vector<8x128xf32> -> vector<8x128xf32>
    %101 = arith.addf %82, %100 : vector<8x128xf32>
    %c0_140 = arith.constant 0 : index
    %c140 = arith.constant 140 : index
    %102 = vector.load %arg8[%c0_140, %c140] : memref<4x384xbf16, #tpu.memory_space<vmem>>, vector<4x128xbf16>
    %c0_141 = arith.constant 0 : index
    %c0_142 = arith.constant 0 : index
    %103 = vector.load %arg9[%c0_141, %c0_142] : memref<28x128xbf16, #tpu.memory_space<vmem>>, vector<4x128xbf16>
    tpu.vector_store %arg9[%c0_141, %c0_142], %102 {strides = array<i32>} : memref<28x128xbf16, #tpu.memory_space<vmem>>, vector<4x128xbf16>,
    %c0_143 = arith.constant 0 : index
    %c141 = arith.constant 141 : index
    %104 = vector.load %arg8[%c0_143, %c141] : memref<4x384xbf16, #tpu.memory_space<vmem>>, vector<4x128xbf16>
    %c4_144 = arith.constant 4 : index
    %c0_145 = arith.constant 0 : index
    %105 = vector.load %arg9[%c4_144, %c0_145] : memref<28x128xbf16, #tpu.memory_space<vmem>>, vector<4x128xbf16>
    tpu.vector_store %arg9[%c4_144, %c0_145], %104 {strides = array<i32>} : memref<28x128xbf16, #tpu.memory_space<vmem>>, vector<4x128xbf16>,
    %c0_146 = arith.constant 0 : index
    %c142 = arith.constant 142 : index
    %106 = vector.load %arg8[%c0_146, %c142] : memref<4x384xbf16, #tpu.memory_space<vmem>>, vector<4x128xbf16>
    %c8_147 = arith.constant 8 : index
    %c0_148 = arith.constant 0 : index
    %107 = vector.load %arg9[%c8_147, %c0_148] : memref<28x128xbf16, #tpu.memory_space<vmem>>, vector<4x128xbf16>
    tpu.vector_store %arg9[%c8_147, %c0_148], %106 {strides = array<i32>} : memref<28x128xbf16, #tpu.memory_space<vmem>>, vector<4x128xbf16>,
    %c0_149 = arith.constant 0 : index
    %c143 = arith.constant 143 : index
    %108 = vector.load %arg8[%c0_149, %c143] : memref<4x384xbf16, #tpu.memory_space<vmem>>, vector<4x128xbf16>
    %c12_150 = arith.constant 12 : index
    %c0_151 = arith.constant 0 : index
    %109 = vector.load %arg9[%c12_150, %c0_151] : memref<28x128xbf16, #tpu.memory_space<vmem>>, vector<4x128xbf16>
    tpu.vector_store %arg9[%c12_150, %c0_151], %108 {strides = array<i32>} : memref<28x128xbf16, #tpu.memory_space<vmem>>, vector<4x128xbf16>,
    %c0_152 = arith.constant 0 : index
    %c144 = arith.constant 144 : index
    %110 = vector.load %arg8[%c0_152, %c144] : memref<4x384xbf16, #tpu.memory_space<vmem>>, vector<4x128xbf16>
    %c16_153 = arith.constant 16 : index
    %c0_154 = arith.constant 0 : index
    %111 = vector.load %arg9[%c16_153, %c0_154] : memref<28x128xbf16, #tpu.memory_space<vmem>>, vector<4x128xbf16>
    tpu.vector_store %arg9[%c16_153, %c0_154], %110 {strides = array<i32>} : memref<28x128xbf16, #tpu.memory_space<vmem>>, vector<4x128xbf16>,
    %c0_155 = arith.constant 0 : index
    %c145 = arith.constant 145 : index
    %112 = vector.load %arg8[%c0_155, %c145] : memref<4x384xbf16, #tpu.memory_space<vmem>>, vector<4x128xbf16>
    %c20_156 = arith.constant 20 : index
    %c0_157 = arith.constant 0 : index
    %113 = vector.load %arg9[%c20_156, %c0_157] : memref<28x128xbf16, #tpu.memory_space<vmem>>, vector<4x128xbf16>
    tpu.vector_store %arg9[%c20_156, %c0_157], %112 {strides = array<i32>} : memref<28x128xbf16, #tpu.memory_space<vmem>>, vector<4x128xbf16>,
    %c0_158 = arith.constant 0 : index
    %c146 = arith.constant 146 : index
    %114 = vector.load %arg8[%c0_158, %c146] : memref<4x384xbf16, #tpu.memory_space<vmem>>, vector<4x128xbf16>
    %c24_159 = arith.constant 24 : index
    %c0_160 = arith.constant 0 : index
    %115 = vector.load %arg9[%c24_159, %c0_160] : memref<28x128xbf16, #tpu.memory_space<vmem>>, vector<4x128xbf16>
    tpu.vector_store %arg9[%c24_159, %c0_160], %114 {strides = array<i32>} : memref<28x128xbf16, #tpu.memory_space<vmem>>, vector<4x128xbf16>,
    %c5_161 = arith.constant 5 : index
    %c0_162 = arith.constant 0 : index
    %c0_163 = arith.constant 0 : index
    %116 = vector.load %arg2[%c5_161, %c0_162, %c0_163] : memref<7x8x28xbf16, #tpu.memory_space<vmem>>, vector<1x8x28xbf16>
    %117 = vector.shape_cast %116 : vector<1x8x28xbf16> to vector<8x28xbf16>
    %c0_164 = arith.constant 0 : index
    %c0_165 = arith.constant 0 : index
    %118 = vector.load %arg9[%c0_164, %c0_165] : memref<28x128xbf16, #tpu.memory_space<vmem>>, vector<28x128xbf16>
    %cst_166 = arith.constant dense<0.000000e+00> : vector<8x128xf32>
    %119 = tpu.matmul %117, %118, %cst_166 {dimension_numbers = #tpu.dot_dimension_numbers<[1], [0], [0], [1], [0, 0, 1, 1], [], []>} : vector<8x28xbf16>, vector<28x128xbf16>, vector<8x128xf32> -> vector<8x128xf32>
    %120 = arith.addf %101, %119 : vector<8x128xf32>
    %c0_167 = arith.constant 0 : index
    %c168 = arith.constant 168 : index
    %121 = vector.load %arg8[%c0_167, %c168] : memref<4x384xbf16, #tpu.memory_space<vmem>>, vector<4x128xbf16>
    %c0_168 = arith.constant 0 : index
    %c0_169 = arith.constant 0 : index
    %122 = vector.load %arg9[%c0_168, %c0_169] : memref<28x128xbf16, #tpu.memory_space<vmem>>, vector<4x128xbf16>
    tpu.vector_store %arg9[%c0_168, %c0_169], %121 {strides = array<i32>} : memref<28x128xbf16, #tpu.memory_space<vmem>>, vector<4x128xbf16>,
    %c0_170 = arith.constant 0 : index
    %c169 = arith.constant 169 : index
    %123 = vector.load %arg8[%c0_170, %c169] : memref<4x384xbf16, #tpu.memory_space<vmem>>, vector<4x128xbf16>
    %c4_171 = arith.constant 4 : index
    %c0_172 = arith.constant 0 : index
    %124 = vector.load %arg9[%c4_171, %c0_172] : memref<28x128xbf16, #tpu.memory_space<vmem>>, vector<4x128xbf16>
    tpu.vector_store %arg9[%c4_171, %c0_172], %123 {strides = array<i32>} : memref<28x128xbf16, #tpu.memory_space<vmem>>, vector<4x128xbf16>,
    %c0_173 = arith.constant 0 : index
    %c170 = arith.constant 170 : index
    %125 = vector.load %arg8[%c0_173, %c170] : memref<4x384xbf16, #tpu.memory_space<vmem>>, vector<4x128xbf16>
    %c8_174 = arith.constant 8 : index
    %c0_175 = arith.constant 0 : index
    %126 = vector.load %arg9[%c8_174, %c0_175] : memref<28x128xbf16, #tpu.memory_space<vmem>>, vector<4x128xbf16>
    tpu.vector_store %arg9[%c8_174, %c0_175], %125 {strides = array<i32>} : memref<28x128xbf16, #tpu.memory_space<vmem>>, vector<4x128xbf16>,
    %c0_176 = arith.constant 0 : index
    %c171 = arith.constant 171 : index
    %127 = vector.load %arg8[%c0_176, %c171] : memref<4x384xbf16, #tpu.memory_space<vmem>>, vector<4x128xbf16>
    %c12_177 = arith.constant 12 : index
    %c0_178 = arith.constant 0 : index
    %128 = vector.load %arg9[%c12_177, %c0_178] : memref<28x128xbf16, #tpu.memory_space<vmem>>, vector<4x128xbf16>
    tpu.vector_store %arg9[%c12_177, %c0_178], %127 {strides = array<i32>} : memref<28x128xbf16, #tpu.memory_space<vmem>>, vector<4x128xbf16>,
    %c0_179 = arith.constant 0 : index
    %c172 = arith.constant 172 : index
    %129 = vector.load %arg8[%c0_179, %c172] : memref<4x384xbf16, #tpu.memory_space<vmem>>, vector<4x128xbf16>
    %c16_180 = arith.constant 16 : index
    %c0_181 = arith.constant 0 : index
    %130 = vector.load %arg9[%c16_180, %c0_181] : memref<28x128xbf16, #tpu.memory_space<vmem>>, vector<4x128xbf16>
    tpu.vector_store %arg9[%c16_180, %c0_181], %129 {strides = array<i32>} : memref<28x128xbf16, #tpu.memory_space<vmem>>, vector<4x128xbf16>,
    %c0_182 = arith.constant 0 : index
    %c173 = arith.constant 173 : index
    %131 = vector.load %arg8[%c0_182, %c173] : memref<4x384xbf16, #tpu.memory_space<vmem>>, vector<4x128xbf16>
    %c20_183 = arith.constant 20 : index
    %c0_184 = arith.constant 0 : index
    %132 = vector.load %arg9[%c20_183, %c0_184] : memref<28x128xbf16, #tpu.memory_space<vmem>>, vector<4x128xbf16>
    tpu.vector_store %arg9[%c20_183, %c0_184], %131 {strides = array<i32>} : memref<28x128xbf16, #tpu.memory_space<vmem>>, vector<4x128xbf16>,
    %c0_185 = arith.constant 0 : index
    %c174 = arith.constant 174 : index
    %133 = vector.load %arg8[%c0_185, %c174] : memref<4x384xbf16, #tpu.memory_space<vmem>>, vector<4x128xbf16>
    %c24_186 = arith.constant 24 : index
    %c0_187 = arith.constant 0 : index
    %134 = vector.load %arg9[%c24_186, %c0_187] : memref<28x128xbf16, #tpu.memory_space<vmem>>, vector<4x128xbf16>
    tpu.vector_store %arg9[%c24_186, %c0_187], %133 {strides = array<i32>} : memref<28x128xbf16, #tpu.memory_space<vmem>>, vector<4x128xbf16>,
    %c6_188 = arith.constant 6 : index
    %c0_189 = arith.constant 0 : index
    %c0_190 = arith.constant 0 : index
    %135 = vector.load %arg2[%c6_188, %c0_189, %c0_190] : memref<7x8x28xbf16, #tpu.memory_space<vmem>>, vector<1x8x28xbf16>
    %136 = vector.shape_cast %135 : vector<1x8x28xbf16> to vector<8x28xbf16>
    %c0_191 = arith.constant 0 : index
    %c0_192 = arith.constant 0 : index
    %137 = vector.load %arg9[%c0_191, %c0_192] : memref<28x128xbf16, #tpu.memory_space<vmem>>, vector<28x128xbf16>
    %cst_193 = arith.constant dense<0.000000e+00> : vector<8x128xf32>
    %138 = tpu.matmul %136, %137, %cst_193 {dimension_numbers = #tpu.dot_dimension_numbers<[1], [0], [0], [1], [0, 0, 1, 1], [], []>} : vector<8x28xbf16>, vector<28x128xbf16>, vector<8x128xf32> -> vector<8x128xf32>
    %139 = arith.addf %120, %138 : vector<8x128xf32>
    %c0_194 = arith.constant 0 : index
    %c0_195 = arith.constant 0 : index
    %140 = vector.load %arg3[%c0_194, %c0_195] : memref<8x1xf32, #tpu.memory_space<vmem>>, vector<8x1xf32>
    %141 = vector.broadcast %140 : vector<8x1xf32> to vector<8x128xf32>
    %142 = arith.addf %139, %141 : vector<8x128xf32>
    %cst_196 = arith.constant 0.000000e+00 : f32
    %143 = vector.broadcast %cst_196 : f32 to vector<8x128xf32>
    %144 = arith.maximumf %142, %143 : vector<8x128xf32>
    %c0_197 = arith.constant 0 : index
    %c0_198 = arith.constant 0 : index
    %145 = vector.load %arg7[%c0_197, %c0_198] : memref<8x128xf32, #tpu.memory_space<vmem>>, vector<8x128xf32>
    tpu.vector_store %arg7[%c0_197, %c0_198], %144 {strides = array<i32>} : memref<8x128xf32, #tpu.memory_space<vmem>>, vector<8x128xf32>,
    return
  }
  func.func @transform_0(%arg0: i32, %arg1: i32) -> (i32, i32, i32) {
    %c0_i32 = arith.constant 0 : i32
    %c0_i32_0 = arith.constant 0 : i32
    %c0_i32_1 = arith.constant 0 : i32
    return %c0_i32, %arg0, %c0_i32_0 : i32, i32, i32
  }
  func.func @transform_1(%arg0: i32, %arg1: i32) -> (i32, i32) {
    %c0_i32 = arith.constant 0 : i32
    %c0_i32_0 = arith.constant 0 : i32
    return %arg0, %c0_i32 : i32, i32
  }
  func.func @transform_2(%arg0: i32, %arg1: i32) -> (i32, i32) {
    %c0_i32 = arith.constant 0 : i32
    %0 = arith.addi %arg1, %c0_i32 : i32
    %c0_i32_0 = arith.constant 0 : i32
    %c0_i32_1 = arith.constant 0 : i32
    return %c0_i32_0, %0 : i32, i32
  }
  func.func @transform_3(%arg0: i32, %arg1: i32) -> (i32, i32) {
    %c1_i32 = arith.constant 1 : i32
    %0 = arith.addi %arg1, %c1_i32 : i32
    %c0_i32 = arith.constant 0 : i32
    %c0_i32_0 = arith.constant 0 : i32
    return %c0_i32, %0 : i32, i32
  }
  func.func @transform_4(%arg0: i32, %arg1: i32) -> (i32, i32) {
    %c2_i32 = arith.constant 2 : i32
    %0 = arith.addi %arg1, %c2_i32 : i32
    %c0_i32 = arith.constant 0 : i32
    %c0_i32_0 = arith.constant 0 : i32
    return %c0_i32, %0 : i32, i32
  }
  func.func @transform_5(%arg0: i32, %arg1: i32) -> (i32, i32) {
    %c0_i32 = arith.constant 0 : i32
    return %arg0, %arg1 : i32, i32
  }
}

</mosaic_0001>

<llo_original>
// kernel: tpu_custom_call.1
$region0: #{tpu_custom_call.1}
  #allocation0 [shape = 'u32[]', space=smem, size = 0x4, offset = 0x4, fixed_abs, tag = 'smem constant byte address 0x4 - core index']
  #allocation1 [shape = 'u32[144,128]{1,0:T(1,128)}', space=vmem, size = 0x12000, scoped, tag = 'internal scratch']
  #allocation2 [shape = 'bf16[4,384]{1,0:T(4,128)(2,1)}', space=vmem, size = 0xc00, scoped, tag = 'scratch operand']
  #allocation3 [shape = 'bf16[28,128]{1,0:T(8,128)(2,1)}', space=vmem, size = 0x2000, scoped, tag = 'scratch operand']
  %s0 = inlined_call_operand.hbm [shape: bf16[7,8,28], index: 0, kind: input, shape index: {}]
  %s1 = inlined_call_operand.vmem [shape: f32[8,1], index: 1, kind: input, shape index: {}]
  %s2 = inlined_call_operand.hbm [shape: bf16[4,1920], index: 2, kind: input, shape index: {}]
  %s3 = inlined_call_operand.hbm [shape: bf16[4,1920], index: 3, kind: input, shape index: {}]
  %s4 = inlined_call_operand.hbm [shape: bf16[4,1920], index: 4, kind: input, shape index: {}]
  %s5 = inlined_call_operand.hbm [shape: f32[8,1664], index: 5, kind: output, shape index: {}]
  %s6 = sld [smem:[#allocation0]]
  $region69: #{tpu_custom_call.1} parent=0
    _
  %s8 = ssub.s32 1, %s6
  %s9 = scalar_select 0, %s8, %s6
  $region1: #{tpu_custom_call.1} parent=0
    #allocation4 [shape = 'u8[14336]{0}', space=vmem, size = 0x3800, scoped, tag = 'input window, operand 0, single buffered']
    #allocation5 [shape = 's32[2]{0}', space=sflag, size = 0x8, scoped, tag = 'scoped memory for tpu_custom_call.1']
    #allocation6 [shape = 's32[2]{0}', space=sflag, size = 0x8, scoped, tag = 'scoped memory for tpu_custom_call.1']
    #allocation7 [shape = 'u8[2048]{0}', space=vmem, size = 0x800, scoped, tag = 'input window, operand 2']
    #allocation8 [shape = 's32[2]{0}', space=sflag, size = 0x8, scoped, tag = 'scoped memory for tpu_custom_call.1']
    #allocation9 [shape = 'u8[2048]{0}', space=vmem, size = 0x800, scoped, tag = 'input window, operand 3']
    #allocation10 [shape = 'u8[2048]{0}', space=vmem, size = 0x800, scoped, tag = 'input window, operand 4']
    #allocation11 [shape = 's32[2]{0}', space=sflag, size = 0x8, scoped, tag = 'scoped memory for tpu_custom_call.1']
    #allocation12 [shape = 'u8[8192]{0}', space=vmem, size = 0x2000, scoped, tag = 'output window, operand 0']
    %10 = vsyncpa [#allocation5], 0
    %11 = vsyncpa [#allocation8], 0
    %s12 = scalar_lea.sflag [#allocation8], 1
    %13 = vsyncpa %s12, 0
    %14 = vsyncpa [#allocation11], 0
    %s15 = scalar_lea.sflag [#allocation11], 1
    %16 = vsyncpa %s15, 0
    %17 = vsyncpa [#allocation6], 0
    %s18 = scalar_lea.sflag [#allocation6], 1
    %19 = vsyncpa %s18, 0
    loop: start=0, step=1, limit=15
    $region2: #{tpu_custom_call.1} parent=1 // loop_pre_header
      _
    $region3: #{tpu_custom_call.1} parent=1 // loop_header
      %s21 = sphi 0, %s25
      %p22 = scmp.ge.s32.totalorder %s21, 15
      %s28 = sphi 0, %s40
      %s29 = sphi 0, %s36
      %s30 = sphi 0, %s28
      %s31 = sphi 0, %s29
      %s32 = sphi 0, %s30
      %s33 = sphi 0, %s31
      %s43 = sphi 0, %s45
      %s46 = sphi 0, %s43
      %s47 = sphi 0, %s46
      %s63 = sphi 0, %s47
      %s69 = sphi 0, %s71
      %s72 = sphi 0, %s69
      %s73 = sphi 0, %s72
      %s89 = sphi 0, %s73
      %s95 = sphi 0, %s97
      %s98 = sphi 0, %s95
      %s99 = sphi 0, %s98
      %s115 = sphi 0, %s99
      %s123 = sphi 0, %s125
      %s126 = sphi 0, %s123
      %s127 = sphi 0, %s126
      %s143 = sphi 0, %s127
      %s151 = sphi 0, %s153
      %s154 = sphi 0, %s151
      %s155 = sphi 0, %s154
      %s171 = sphi 0, %s155
      %s179 = sphi 0, %s181
      %s182 = sphi 0, %s179
      %s183 = sphi 0, %s182
      %s199 = sphi 0, %s183
    $region4: #{tpu_custom_call.1} parent=1 // loop_header_branch
      %24 = sbr.rel (%p22) target = $region8
    $region5: #{tpu_custom_call.1} parent=1 // loop_body
      %s26 = ssub.s32 %s21, 1
      %s27 = ssub.s32 %s21, 2
      %s34 = sadd.s32 1, %s29
      %p35 = scmp.ge.s32.totalorder %s34, 13
      %s36 = scalar_select %p35, 0, %s34
      %s37 = sadd.s32 1, %s28
      %s38 = scalar_select %p35, %s37, %s28
      %p39 = scmp.ge.s32.totalorder %s38, 1
      %s40 = scalar_select %p39, 0, %s38
      %s41 = ssub.s32 %s28, %s40
      %p42 = scmp.eq.s32.totalorder %s41, 0
      %s44 = sadd.s32 %s43, 1
      %s45 = scalar_select %p42, %s43, %s44
      %p48 = pneg %p42
      %p49 = scmp.eq.s32.totalorder %s21, 12
      %p50 = por %p48, %p49
      %p51 = scmp.ne.s32.totalorder %s43, %s46
      %p52 = scmp.eq.s32.totalorder %s21, 0
      %p53 = por %p51, %p52
      %p54 = scmp.ne.s32.totalorder %s43, %s46
      %p55 = scmp.eq.s32.totalorder %s26, 12
      %p56 = por %p54, %p55
      %p57 = scmp.ne.s32.totalorder %s46, %s47
      %p58 = scmp.eq.s32.totalorder %s26, 0
      %p59 = por %p57, %p58
      %p60 = scmp.ne.s32.totalorder %s46, %s47
      %p61 = scmp.eq.s32.totalorder %s27, 12
      %p62 = por %p60, %p61
      %p64 = scmp.ne.s32.totalorder %s47, %s63
      %p65 = scmp.eq.s32.totalorder %s27, 0
      %p66 = por %p64, %p65
      %s67 = ssub.s32 %s28, %s40
      %p68 = scmp.eq.s32.totalorder %s67, 0
      %s70 = sadd.s32 %s69, 1
      %s71 = scalar_select %p68, %s69, %s70
      %p74 = pneg %p68
      %p75 = scmp.eq.s32.totalorder %s21, 12
      %p76 = por %p74, %p75
      %p77 = scmp.ne.s32.totalorder %s69, %s72
      %p78 = scmp.eq.s32.totalorder %s21, 0
      %p79 = por %p77, %p78
      %p80 = scmp.ne.s32.totalorder %s69, %s72
      %p81 = scmp.eq.s32.totalorder %s26, 12
      %p82 = por %p80, %p81
      %p83 = scmp.ne.s32.totalorder %s72, %s73
      %p84 = scmp.eq.s32.totalorder %s26, 0
      %p85 = por %p83, %p84
      %p86 = scmp.ne.s32.totalorder %s72, %s73
      %p87 = scmp.eq.s32.totalorder %s27, 12
      %p88 = por %p86, %p87
      %p90 = scmp.ne.s32.totalorder %s73, %s89
      %p91 = scmp.eq.s32.totalorder %s27, 0
      %p92 = por %p90, %p91
      %s93 = ssub.s32 %s29, %s36
      %p94 = scmp.eq.s32.totalorder %s93, 0
      %s96 = sadd.s32 %s95, 1
      %s97 = scalar_select %p94, %s95, %s96
      %p100 = pneg %p94
      %p101 = scmp.eq.s32.totalorder %s21, 12
      %p102 = por %p100, %p101
      %p103 = scmp.ne.s32.totalorder %s95, %s98
      %p104 = scmp.eq.s32.totalorder %s21, 0
      %p105 = por %p103, %p104
      %p106 = scmp.ne.s32.totalorder %s95, %s98
      %p107 = scmp.eq.s32.totalorder %s26, 12
      %p108 = por %p106, %p107
      %p109 = scmp.ne.s32.totalorder %s98, %s99
      %p110 = scmp.eq.s32.totalorder %s26, 0
      %p111 = por %p109, %p110
      %p112 = scmp.ne.s32.totalorder %s98, %s99
      %p113 = scmp.eq.s32.totalorder %s27, 12
      %p114 = por %p112, %p113
      %p116 = scmp.ne.s32.totalorder %s99, %s115
      %p117 = scmp.eq.s32.totalorder %s27, 0
      %p118 = por %p116, %p117
      %s119 = sadd.s32 %s29, 1
      %s120 = sadd.s32 %s36, 1
      %s121 = ssub.s32 %s119, %s120
      %p122 = scmp.eq.s32.totalorder %s121, 0
      %s124 = sadd.s32 %s123, 1
      %s125 = scalar_select %p122, %s123, %s124
      %p128 = pneg %p122
      %p129 = scmp.eq.s32.totalorder %s21, 12
      %p130 = por %p128, %p129
      %p131 = scmp.ne.s32.totalorder %s123, %s126
      %p132 = scmp.eq.s32.totalorder %s21, 0
      %p133 = por %p131, %p132
      %p134 = scmp.ne.s32.totalorder %s123, %s126
      %p135 = scmp.eq.s32.totalorder %s26, 12
      %p136 = por %p134, %p135
      %p137 = scmp.ne.s32.totalorder %s126, %s127
      %p138 = scmp.eq.s32.totalorder %s26, 0
      %p139 = por %p137, %p138
      %p140 = scmp.ne.s32.totalorder %s126, %s127
      %p141 = scmp.eq.s32.totalorder %s27, 12
      %p142 = por %p140, %p141
      %p144 = scmp.ne.s32.totalorder %s127, %s143
      %p145 = scmp.eq.s32.totalorder %s27, 0
      %p146 = por %p144, %p145
      %s147 = sadd.s32 %s29, 2
      %s148 = sadd.s32 %s36, 2
      %s149 = ssub.s32 %s147, %s148
      %p150 = scmp.eq.s32.totalorder %s149, 0
      %s152 = sadd.s32 %s151, 1
      %s153 = scalar_select %p150, %s151, %s152
      %p156 = pneg %p150
      %p157 = scmp.eq.s32.totalorder %s21, 12
      %p158 = por %p156, %p157
      %p159 = scmp.ne.s32.totalorder %s151, %s154
      %p160 = scmp.eq.s32.totalorder %s21, 0
      %p161 = por %p159, %p160
      %p162 = scmp.ne.s32.totalorder %s151, %s154
      %p163 = scmp.eq.s32.totalorder %s26, 12
      %p164 = por %p162, %p163
      %p165 = scmp.ne.s32.totalorder %s154, %s155
      %p166 = scmp.eq.s32.totalorder %s26, 0
      %p167 = por %p165, %p166
      %p168 = scmp.ne.s32.totalorder %s154, %s155
      %p169 = scmp.eq.s32.totalorder %s27, 12
      %p170 = por %p168, %p169
      %p172 = scmp.ne.s32.totalorder %s155, %s171
      %p173 = scmp.eq.s32.totalorder %s27, 0
      %p174 = por %p172, %p173
      %s175 = ssub.s32 %s28, %s40
      %s176 = ssub.s32 %s29, %s36
      %s177 = sor.u32 %s175, %s176
      %p178 = scmp.eq.s32.totalorder %s177, 0
      %s180 = sadd.s32 %s179, 1
      %s181 = scalar_select %p178, %s179, %s180
      %p184 = pneg %p178
      %p185 = scmp.eq.s32.totalorder %s21, 12
      %p186 = por %p184, %p185
      %p187 = scmp.ne.s32.totalorder %s179, %s182
      %p188 = scmp.eq.s32.totalorder %s21, 0
      %p189 = por %p187, %p188
      %p190 = scmp.ne.s32.totalorder %s179, %s182
      %p191 = scmp.eq.s32.totalorder %s26, 12
      %p192 = por %p190, %p191
      %p193 = scmp.ne.s32.totalorder %s182, %s183
      %p194 = scmp.eq.s32.totalorder %s26, 0
      %p195 = por %p193, %p194
      %p196 = scmp.ne.s32.totalorder %s182, %s183
      %p197 = scmp.eq.s32.totalorder %s27, 12
      %p198 = por %p196, %p197
      %p200 = scmp.ne.s32.totalorder %s183, %s199
      %p201 = scmp.eq.s32.totalorder %s27, 0
      %p202 = por %p200, %p201
      %p203 = scmp.le.s32.totalorder 1, %s21
      %p204 = scmp.lt.s32.totalorder %s21, 14
      %p205 = pnand %p203, %p204
      %p206 = pneg %p205
      // Predicated region
      $region9: #{tpu_custom_call.1} parent=5 // pred_check
        _
      $region10: #{tpu_custom_call.1} parent=5 // pred_check_branch
        %208 = sbr.rel (%p205) target = $region12
      $region11: #{tpu_custom_call.1} parent=5 // pred_region
        %s209 = ssub.s32 %s21, 1
        // Predicated region
        $region13: #{tpu_custom_call.1} parent=11 // pred_check
          %p210 = pneg %p59
        $region14: #{tpu_custom_call.1} parent=11 // pred_check_branch
          %212 = sbr.rel (%p210) target = $region16
        $region15: #{tpu_custom_call.1} parent=11 // pred_region
          %s214 = ssub.s32 448, 448
          %215 = vsyncadd [#allocation5], %s214
          %s216 = smul.addr %s30, 64
          %s217 = scalar_lea.hbm %s0, %s216
          %s218 = sshll.u32 [#allocation4], 4
          %s219 = int_to_ptr.vmem [resolvable:$true] %s218
          %224 = dma.hbm_to_vmem [thread:$0]  %s217, 448, %s219, [#allocation5], 64, 64, 4
        $region16: #{tpu_custom_call.1} parent=11 // pred_fallthru
          _
        // Predicated region
        $region17: #{tpu_custom_call.1} parent=11 // pred_check
          %p225 = pneg %p85
        $region18: #{tpu_custom_call.1} parent=11 // pred_check_branch
          %227 = sbr.rel (%p225) target = $region20
        $region19: #{tpu_custom_call.1} parent=11 // pred_region
          %p228 = scmp.lt.s32.totalorder %s30, 0
          %s229 = scalar_select %p228, %s30, 0
          %s230 = smul.addr %s229, 8
          %s231 = scalar_lea.vmem %s1, %s230
        $region20: #{tpu_custom_call.1} parent=11 // pred_fallthru
          _
      $region12: #{tpu_custom_call.1} parent=5 // pred_fallthru
        _
      %p232 = scmp.lt.s32.totalorder %s21, 13
      // Predicated region
      $region21: #{tpu_custom_call.1} parent=5 // pred_check
        %p233 = pneg %p232
      $region22: #{tpu_custom_call.1} parent=5 // pred_check_branch
        %235 = sbr.rel (%p233) target = $region24
      $region23: #{tpu_custom_call.1} parent=5 // pred_region
        // Predicated region
        $region25: #{tpu_custom_call.1} parent=23 // pred_check
          %p236 = pneg %p105
        $region26: #{tpu_custom_call.1} parent=23 // pred_check_branch
          %238 = sbr.rel (%p236) target = $region28
        $region27: #{tpu_custom_call.1} parent=23 // pred_region
          %s239 = sand.u32 %s21, 1
          %s240 = scalar_lea.sflag [#allocation8], %s239
          %s241 = sand.u32 %s95, 1
          %s242 = smul.addr %s241, 2
          %s243 = scalar_lea.vmem [#allocation7], %s242
          %s245 = ssub.s32 32, 32
          %246 = vsyncadd %s240, %s245
          %s247 = smul.addr %s29, 32
          %s248 = scalar_lea.hbm %s2, %s247
          %s250 = sshll.u32 %s243, 4
          %s251 = int_to_ptr.vmem [resolvable:$true] %s250
          %253 = dma.hbm_to_vmem [thread:$0]  %s248, 32, %s251, %s240
        $region28: #{tpu_custom_call.1} parent=23 // pred_fallthru
          _
        // Predicated region
        $region29: #{tpu_custom_call.1} parent=23 // pred_check
          %p254 = pneg %p133
        $region30: #{tpu_custom_call.1} parent=23 // pred_check_branch
          %256 = sbr.rel (%p254) target = $region32
        $region31: #{tpu_custom_call.1} parent=23 // pred_region
          %s257 = sand.u32 %s21, 1
          %s258 = scalar_lea.sflag [#allocation8], %s257
          %s259 = sand.u32 %s123, 1
          %s260 = smul.addr %s259, 2
          %s261 = scalar_lea.vmem [#allocation9], %s260
          %s262 = sadd.s32 %s29, 1
          %s264 = ssub.s32 32, 32
          %265 = vsyncadd %s258, %s264
          %s266 = smul.addr %s262, 32
          %s267 = scalar_lea.hbm %s3, %s266
          %s269 = sshll.u32 %s261, 4
          %s270 = int_to_ptr.vmem [resolvable:$true] %s269
          %272 = dma.hbm_to_vmem [thread:$0]  %s267, 32, %s270, %s258
        $region32: #{tpu_custom_call.1} parent=23 // pred_fallthru
          _
        // Predicated region
        $region33: #{tpu_custom_call.1} parent=23 // pred_check
          %p273 = pneg %p161
        $region34: #{tpu_custom_call.1} parent=23 // pred_check_branch
          %275 = sbr.rel (%p273) target = $region36
        $region35: #{tpu_custom_call.1} parent=23 // pred_region
          %s276 = sand.u32 %s151, 1
          %s277 = scalar_lea.sflag [#allocation11], %s276
          %s278 = sand.u32 %s151, 1
          %s279 = smul.addr %s278, 2
          %s280 = scalar_lea.vmem [#allocation10], %s279
          %s281 = sadd.s32 %s29, 2
          %s283 = ssub.s32 32, 32
          %284 = vsyncadd %s277, %s283
          %s285 = smul.addr %s281, 32
          %s286 = scalar_lea.hbm %s4, %s285
          %s288 = sshll.u32 %s280, 4
          %s289 = int_to_ptr.vmem [resolvable:$true] %s288
          %291 = dma.hbm_to_vmem [thread:$0]  %s286, 32, %s289, %s277
        $region36: #{tpu_custom_call.1} parent=23 // pred_fallthru
          _
      $region24: #{tpu_custom_call.1} parent=5 // pred_fallthru
        _
      %p292 = scmp.le.s32.totalorder 1, %s21
      %p293 = scmp.lt.s32.totalorder %s21, 14
      %p294 = pnand %p292, %p293
      %p295 = pneg %p294
      // Predicated region
      $region37: #{tpu_custom_call.1} parent=5 // pred_check
        _
      $region38: #{tpu_custom_call.1} parent=5 // pred_check_branch
        %297 = sbr.rel (%p294) target = $region40
      $region39: #{tpu_custom_call.1} parent=5 // pred_region
        %s298 = ssub.s32 %s21, 1
        // Predicated region
        $region41: #{tpu_custom_call.1} parent=39 // pred_check
          %p299 = pneg %p59
        $region42: #{tpu_custom_call.1} parent=39 // pred_check_branch
          %301 = sbr.rel (%p299) target = $region44
        $region43: #{tpu_custom_call.1} parent=39 // pred_region
          %302 = dma.done [#allocation5], 448
        $region44: #{tpu_custom_call.1} parent=39 // pred_fallthru
          _
        %s303 = sand.u32 %s26, 1
        %s304 = scalar_lea.sflag [#allocation8], %s303
        %s305 = sand.u32 %s98, 1
        %s306 = smul.addr %s305, 2
        %s307 = scalar_lea.vmem [#allocation7], %s306
        // Predicated region
        $region45: #{tpu_custom_call.1} parent=39 // pred_check
          %p308 = pneg %p111
        $region46: #{tpu_custom_call.1} parent=39 // pred_check_branch
          %310 = sbr.rel (%p308) target = $region48
        $region47: #{tpu_custom_call.1} parent=39 // pred_region
          %311 = dma.done %s304, 32
        $region48: #{tpu_custom_call.1} parent=39 // pred_fallthru
          _
        %s312 = sand.u32 %s26, 1
        %s313 = scalar_lea.sflag [#allocation8], %s312
        %s314 = sand.u32 %s126, 1
        %s315 = smul.addr %s314, 2
        %s316 = scalar_lea.vmem [#allocation9], %s315
        // Predicated region
        $region49: #{tpu_custom_call.1} parent=39 // pred_check
          %p317 = pneg %p139
        $region50: #{tpu_custom_call.1} parent=39 // pred_check_branch
          %319 = sbr.rel (%p317) target = $region52
        $region51: #{tpu_custom_call.1} parent=39 // pred_region
          %320 = dma.done %s313, 32
        $region52: #{tpu_custom_call.1} parent=39 // pred_fallthru
          _
        %s321 = sand.u32 %s154, 1
        %s322 = scalar_lea.sflag [#allocation11], %s321
        %s323 = sand.u32 %s154, 1
        %s324 = smul.addr %s323, 2
        %s325 = scalar_lea.vmem [#allocation10], %s324
        // Predicated region
        $region53: #{tpu_custom_call.1} parent=39 // pred_check
          %p326 = pneg %p167
        $region54: #{tpu_custom_call.1} parent=39 // pred_check_branch
          %328 = sbr.rel (%p326) target = $region56
        $region55: #{tpu_custom_call.1} parent=39 // pred_region
          %329 = dma.done %s322, 32
        $region56: #{tpu_custom_call.1} parent=39 // pred_fallthru
          _
        %p330 = pneg %p59
        %p331 = pneg %p56
        %p332 = scmp.lt.s32.totalorder %s30, 0
        %s333 = scalar_select %p332, %s30, 0
        %s334 = smul.addr %s333, 8
        %s335 = scalar_lea.vmem %s1, %s334
        %p336 = pneg %p85
        %p337 = pneg %p82
        %s338 = sand.u32 %s26, 1
        %s339 = scalar_lea.sflag [#allocation8], %s338
        %s340 = sand.u32 %s98, 1
        %s341 = smul.addr %s340, 2
        %s342 = scalar_lea.vmem [#allocation7], %s341
        %p343 = pneg %p111
        %p344 = pneg %p108
        %s345 = sand.u32 %s26, 1
        %s346 = scalar_lea.sflag [#allocation8], %s345
        %s347 = sand.u32 %s126, 1
        %s348 = smul.addr %s347, 2
        %s349 = scalar_lea.vmem [#allocation9], %s348
        %p350 = pneg %p139
        %p351 = pneg %p136
        %s352 = sand.u32 %s154, 1
        %s353 = scalar_lea.sflag [#allocation11], %s352
        %s354 = sand.u32 %s154, 1
        %s355 = smul.addr %s354, 2
        %s356 = scalar_lea.vmem [#allocation10], %s355
        %p357 = pneg %p167
        %p358 = pneg %p164
        %p359 = pneg %p195
        %p360 = pneg %p192
        %s361 = sand.u32 %s182, 1
        %s362 = scalar_lea.sflag [#allocation6], %s361
        %s363 = sand.u32 %s182, 1
        %s364 = smul.addr %s363, 8
        %s365 = scalar_lea.vmem [#allocation12], %s364
        %p366 = scmp.lt.s32.totalorder %s30, 0
        %s367 = scalar_select %p366, %s30, 0
        %s368 = smul.addr %s367, 8
        %s369 = scalar_lea.vmem %s1, %s368
        %s370 = sadd.s32 %s31, 1
        %s371 = sadd.s32 %s31, 2
        %v373 = vld [vmem:[%s307] sm:$0x3]
        %374 = vst [vmem:[#allocation2] sm:$0x3] %v373
        %v375 = vld [vmem:[%s316] sm:$0x3]
        %376 = vst [vmem:[#allocation2 + $0x2] sm:$0x3] %v375
        %v377 = vld [vmem:[%s325] sm:$0x3]
        %378 = vst [vmem:[#allocation2 + $0x4] sm:$0x3] %v377
        %v379 = vld [vmem:[#allocation2] sm:$0x3]
        %380 = vst [vmem:[#allocation3] sm:$0x3] %v379
        %v381 = vld [vmem:[#allocation2] sm:$0xf]
        %v383 = vcombine.low %v381, %v381
        %v385 = vunpack.c.l.s4 1983009808
        %v386 = vunpack.c.0.s8 %v385
        %v387 = vlaneseq
        %v388 = vshrl.u32 %v387, 7
        %v389 = vsub.s32 %v386, %v388
        %v390 = vrot.slane %v383, %v389
        %391 = vrot.lane.b32.xlu0 %v390, 127
        %v392 = vpop.permute.xlu0 %391
        %v393 = vrot.slane %v392, 4
        %vm394 = vcmask 1039360
        %v395 = vsel %vm394, %v392, %v393
        %397 = vst [vmem:[#allocation3] sm:$0xc] %v395
        %v398 = vld [vmem:[#allocation2] sm:$0xf]
        %v401 = vunpack.c.l.s4 1983009808
        %v402 = vunpack.c.0.s8 %v401
        %v403 = vlaneseq
        %v404 = vshrl.u32 %v403, 7
        %v405 = vsub.s32 %v402, %v404
        %v406 = vrot.slane %v398, %v405
        %407 = vrot.lane.b32.xlu0 %v406, 126
        %v408 = vpop.permute.xlu0 %407
        %v409 = vrot.slane %v408, 4
        %vm410 = vcmask 1031168
        %v411 = vsel %vm410, %v408, %v409
        %413 = vst [vmem:[#allocation3 + $0x4] sm:$0x3] %v411
        %v414 = vld [vmem:[#allocation2] sm:$0xf]
        %v416 = vcombine.low %v414, %v414
        %v418 = vunpack.c.l.s4 1983009808
        %v419 = vunpack.c.0.s8 %v418
        %v420 = vlaneseq
        %v421 = vshrl.u32 %v420, 7
        %v422 = vsub.s32 %v419, %v421
        %v423 = vrot.slane %v416, %v422
        %424 = vrot.lane.b32.xlu0 %v423, 125
        %v425 = vpop.permute.xlu0 %424
        %v426 = vrot.slane %v425, 4
        %vm427 = vcmask 1022976
        %v428 = vsel %vm427, %v425, %v426
        %430 = vst [vmem:[#allocation3 + $0x4] sm:$0xc] %v428
        %v431 = vld [vmem:[#allocation2] sm:$0xf]
        %v434 = vunpack.c.l.s4 1983009808
        %v435 = vunpack.c.0.s8 %v434
        %v436 = vlaneseq
        %v437 = vshrl.u32 %v436, 7
        %v438 = vsub.s32 %v435, %v437
        %v439 = vrot.slane %v431, %v438
        %440 = vrot.lane.b32.xlu0 %v439, 124
        %v441 = vpop.permute.xlu0 %440
        %v442 = vrot.slane %v441, 4
        %vm443 = vcmask 1014784
        %v444 = vsel %vm443, %v441, %v442
        %446 = vst [vmem:[#allocation3 + $0x8] sm:$0x3] %v444
        %v447 = vld [vmem:[#allocation2] sm:$0xf]
        %v449 = vcombine.low %v447, %v447
        %v451 = vunpack.c.l.s4 1983009808
        %v452 = vunpack.c.0.s8 %v451
        %v453 = vlaneseq
        %v454 = vshrl.u32 %v453, 7
        %v455 = vsub.s32 %v452, %v454
        %v456 = vrot.slane %v449, %v455
        %457 = vrot.lane.b32.xlu0 %v456, 123
        %v458 = vpop.permute.xlu0 %457
        %v459 = vrot.slane %v458, 4
        %vm460 = vcmask 1006592
        %v461 = vsel %vm460, %v458, %v459
        %463 = vst [vmem:[#allocation3 + $0x8] sm:$0xc] %v461
        %v464 = vld [vmem:[#allocation2] sm:$0xf]
        %v467 = vunpack.c.l.s4 1983009808
        %v468 = vunpack.c.0.s8 %v467
        %v469 = vlaneseq
        %v470 = vshrl.u32 %v469, 7
        %v471 = vsub.s32 %v468, %v470
        %v472 = vrot.slane %v464, %v471
        %473 = vrot.lane.b32.xlu0 %v472, 122
        %v474 = vpop.permute.xlu0 %473
        %v475 = vrot.slane %v474, 4
        %vm476 = vcmask 998400
        %v477 = vsel %vm476, %v474, %v475
        %479 = vst [vmem:[#allocation3 + $0xc] sm:$0x3] %v477
        %v480 = vld [vmem:[#allocation4] sm:$0xf]
        %v481 = vld [vmem:[#allocation3] sm:$0xf]
        %v482 = vld [vmem:[#allocation3 + $0x4] sm:$0xf]
        %v483 = vld [vmem:[#allocation3 + $0x8] sm:$0xf]
        %v484 = vld [vmem:[#allocation3 + $0xc] sm:$0x3]
        %v485 = vld [vmem:[#allocation2] sm:$0xf]
        %v488 = vunpack.c.l.s4 1983009808
        %v489 = vunpack.c.0.s8 %v488
        %v490 = vlaneseq
        %v491 = vshrl.u32 %v490, 7
        %v492 = vsub.s32 %v489, %v491
        %v493 = vrot.slane %v485, %v492
        %494 = vrot.lane.b32.xlu0 %v493, 100
        %v495 = vpop.permute.xlu0 %494
        %v496 = vrot.slane %v495, 4
        %vm497 = vcmask 818176
        %v498 = vsel %vm497, %v495, %v496
        %500 = vst [vmem:[#allocation3] sm:$0x3] %v498
        %v501 = vld [vmem:[#allocation2] sm:$0xf]
        %v503 = vcombine.low %v501, %v501
        %v505 = vunpack.c.l.s4 1983009808
        %v506 = vunpack.c.0.s8 %v505
        %v507 = vlaneseq
        %v508 = vshrl.u32 %v507, 7
        %v509 = vsub.s32 %v506, %v508
        %v510 = vrot.slane %v503, %v509
        %511 = vrot.lane.b32.xlu0 %v510, 99
        %v512 = vpop.permute.xlu0 %511
        %v513 = vrot.slane %v512, 4
        %vm514 = vcmask 809984
        %v515 = vsel %vm514, %v512, %v513
        %517 = vst [vmem:[#allocation3] sm:$0xc] %v515
        %v518 = vld [vmem:[#allocation2] sm:$0xf]
        %v521 = vunpack.c.l.s4 1983009808
        %v522 = vunpack.c.0.s8 %v521
        %v523 = vlaneseq
        %v524 = vshrl.u32 %v523, 7
        %v525 = vsub.s32 %v522, %v524
        %v526 = vrot.slane %v518, %v525
        %527 = vrot.lane.b32.xlu0 %v526, 98
        %v528 = vpop.permute.xlu0 %527
        %v529 = vrot.slane %v528, 4
        %vm530 = vcmask 801792
        %v531 = vsel %vm530, %v528, %v529
        %533 = vst [vmem:[#allocation3 + $0x4] sm:$0x3] %v531
        %v534 = vld [vmem:[#allocation2] sm:$0xf]
        %v536 = vcombine.low %v534, %v534
        %v538 = vunpack.c.l.s4 1983009808
        %v539 = vunpack.c.0.s8 %v538
        %v540 = vlaneseq
        %v541 = vshrl.u32 %v540, 7
        %v542 = vsub.s32 %v539, %v541
        %v543 = vrot.slane %v536, %v542
        %544 = vrot.lane.b32.xlu0 %v543, 97
        %v545 = vpop.permute.xlu0 %544
        %v546 = vrot.slane %v545, 4
        %vm547 = vcmask 793600
        %v548 = vsel %vm547, %v545, %v546
        %550 = vst [vmem:[#allocation3 + $0x4] sm:$0xc] %v548
        %v551 = vld [vmem:[#allocation2] sm:$0xf]
        %v554 = vunpack.c.l.s4 1983009808
        %v555 = vunpack.c.0.s8 %v554
        %v556 = vlaneseq
        %v557 = vshrl.u32 %v556, 7
        %v558 = vsub.s32 %v555, %v557
        %v559 = vrot.slane %v551, %v558
        %560 = vrot.lane.b32.xlu0 %v559, 96
        %v561 = vpop.permute.xlu0 %560
        %v562 = vrot.slane %v561, 4
        %vm563 = vcmask 785408
        %v564 = vsel %vm563, %v561, %v562
        %566 = vst [vmem:[#allocation3 + $0x8] sm:$0x3] %v564
        %v567 = vld [vmem:[#allocation2] sm:$0xf]
        %v569 = vcombine.low %v567, %v567
        %v571 = vunpack.c.l.s4 1983009808
        %v572 = vunpack.c.0.s8 %v571
        %v573 = vlaneseq
        %v574 = vshrl.u32 %v573, 7
        %v575 = vsub.s32 %v572, %v574
        %v576 = vrot.slane %v569, %v575
        %577 = vrot.lane.b32.xlu0 %v576, 95
        %v578 = vpop.permute.xlu0 %577
        %v579 = vrot.slane %v578, 4
        %vm580 = vcmask 777216
        %v581 = vsel %vm580, %v578, %v579
        %583 = vst [vmem:[#allocation3 + $0x8] sm:$0xc] %v581
        %v584 = vld [vmem:[#allocation2] sm:$0xf]
        %v587 = vunpack.c.l.s4 1983009808
        %v588 = vunpack.c.0.s8 %v587
        %v589 = vlaneseq
        %v590 = vshrl.u32 %v589, 7
        %v591 = vsub.s32 %v588, %v590
        %v592 = vrot.slane %v584, %v591
        %593 = vrot.lane.b32.xlu0 %v592, 94
        %v594 = vpop.permute.xlu0 %593
        %v595 = vrot.slane %v594, 4
        %vm596 = vcmask 769024
        %v597 = vsel %vm596, %v594, %v595
        %599 = vst [vmem:[#allocation3 + $0xc] sm:$0x3] %v597
        %s600 = scalar_lea.vmem [#allocation4], 4
        %v601 = vld [vmem:[%s600] sm:$0xf]
        %v602 = vld [vmem:[#allocation3] sm:$0xf]
        %v603 = vld [vmem:[#allocation3 + $0x4] sm:$0xf]
        %v604 = vld [vmem:[#allocation3 + $0x8] sm:$0xf]
        %v605 = vld [vmem:[#allocation3 + $0xc] sm:$0x3]
        %v610 = vunpack.c.l.b16 %v602
        %v611 = vunpack.c.l.b16 %v603
        %v612 = vunpack.c.l.b16 %v604
        %v613 = vunpack.c.l.b16 %v605
        %v614 = vpack.c.b16 %v611, %v610
        %v615 = vpack.c.b16 %v613, %v612
        %vm617 = vcmask 228352
        %v619 = vsel %vm617, %v601, 0
        %vm621 = vcmask 1045504
        %v623 = vsel %vm621, %v615, 0
        %625 = vmatprep.subr.bf16.mxu0 0
        %626 = vmatpush1.bf16.msra.mxu0 0
        %627 = vmatprep.subr.bf16.mxu0 0
        %628 = vmatpush1.bf16.msra.mxu0 0
        %629 = vmatprep.subr.bf16.mxu0 0
        %630 = vmatpush1.bf16.msra.mxu0 0
        %631 = vmatprep.subr.bf16.mxu0 0
        %632 = vmatpush1.bf16.msra.mxu0 0
        %633 = vmatprep.subr.bf16.mxu0 0
        %634 = vmatpush1.bf16.msra.mxu0 0
        %635 = vmatprep.subr.bf16.mxu0 0
        %636 = vmatpush1.bf16.msra.mxu0 0
        %637 = vmatprep.subr.bf16.mxu0 0
        %638 = vmatpush1.bf16.msra.mxu0 %v623
        %639 = vmatprep.subr.bf16.mxu0 0
        %640 = vmatpush1.bf16.msra.mxu0 %v614
        %641 = vmatprep.subr.bf16.mxu0 0
        %642 = vmatpush2.bf16.msra.mxu0 0
        %643 = vmatprep.subr.bf16.mxu0 0
        %644 = vmatpush2.bf16.msra.mxu0 0
        %645 = vmatprep.subr.bf16.mxu0 0
        %646 = vmatpush2.bf16.msra.mxu0 0
        %647 = vmatprep.subr.bf16.mxu0 0
        %648 = vmatpush2.bf16.msra.mxu0 0
        %649 = vmatprep.subr.bf16.mxu0 0
        %650 = vmatpush2.bf16.msra.mxu0 0
        %651 = vmatprep.subr.bf16.mxu0 0
        %652 = vmatpush2.bf16.msra.mxu0 0
        %653 = vmatprep.subr.bf16.mxu0 0
        %654 = vmatpush2.bf16.msra.mxu0 0
        %655 = vmatprep.subr.bf16.mxu0 0
        %656 = vmatpush2.bf16.msra.mxu0 0
        %657 = vmatprep.mubr.bf16.mxu0 0
        %658 = vmatmul.mubr.bf16.gmra.mxu0 %v619
        %v659 = vpop.f32.mrf.mxu0
        %v660 = vadd.f32 0.0, %v659
        %v661 = vpop.f32.mrf.mxu0
        %v662 = vpop.f32.mrf.mxu0
        %v663 = vpop.f32.mrf.mxu0
        %664 = vdwg.mxu0
        %v669 = vunpack.c.l.b16 %v481
        %v670 = vunpack.c.l.b16 %v482
        %v671 = vunpack.c.l.b16 %v483
        %v672 = vunpack.c.l.b16 %v484
        %v673 = vpack.c.b16 %v670, %v669
        %v674 = vpack.c.b16 %v672, %v671
        %v677 = vsel %vm617, %v480, 0
        %v680 = vsel %vm621, %v674, 0
        %682 = vmatprep.subr.bf16.mxu0 0
        %683 = vmatpush1.bf16.msra.mxu0 0
        %684 = vmatprep.subr.bf16.mxu0 0
        %685 = vmatpush1.bf16.msra.mxu0 0
        %686 = vmatprep.subr.bf16.mxu0 0
        %687 = vmatpush1.bf16.msra.mxu0 0
        %688 = vmatprep.subr.bf16.mxu0 0
        %689 = vmatpush1.bf16.msra.mxu0 0
        %690 = vmatprep.subr.bf16.mxu0 0
        %691 = vmatpush1.bf16.msra.mxu0 0
        %692 = vmatprep.subr.bf16.mxu0 0
        %693 = vmatpush1.bf16.msra.mxu0 0
        %694 = vmatprep.subr.bf16.mxu0 0
        %695 = vmatpush1.bf16.msra.mxu0 %v680
        %696 = vmatprep.subr.bf16.mxu0 0
        %697 = vmatpush1.bf16.msra.mxu0 %v673
        %698 = vmatprep.subr.bf16.mxu0 0
        %699 = vmatpush2.bf16.msra.mxu0 0
        %700 = vmatprep.subr.bf16.mxu0 0
        %701 = vmatpush2.bf16.msra.mxu0 0
        %702 = vmatprep.subr.bf16.mxu0 0
        %703 = vmatpush2.bf16.msra.mxu0 0
        %704 = vmatprep.subr.bf16.mxu0 0
        %705 = vmatpush2.bf16.msra.mxu0 0
        %706 = vmatprep.subr.bf16.mxu0 0
        %707 = vmatpush2.bf16.msra.mxu0 0
        %708 = vmatprep.subr.bf16.mxu0 0
        %709 = vmatpush2.bf16.msra.mxu0 0
        %710 = vmatprep.subr.bf16.mxu0 0
        %711 = vmatpush2.bf16.msra.mxu0 0
        %712 = vmatprep.subr.bf16.mxu0 0
        %713 = vmatpush2.bf16.msra.mxu0 0
        %714 = vmatprep.mubr.bf16.mxu0 0
        %715 = vmatmul.mubr.bf16.gmra.mxu0 %v677
        %v716 = vpop.f32.mrf.mxu0
        %v717 = vadd.f32 %v660, %v716
        %v718 = vpop.f32.mrf.mxu0
        %v719 = vpop.f32.mrf.mxu0
        %v720 = vpop.f32.mrf.mxu0
        %721 = vdwg.mxu0
        %v722 = vld [vmem:[#allocation2] sm:$0xf]
        %v725 = vunpack.c.l.s4 1983009808
        %v726 = vunpack.c.0.s8 %v725
        %v727 = vlaneseq
        %v728 = vshrl.u32 %v727, 7
        %v729 = vsub.s32 %v726, %v728
        %v730 = vrot.slane %v722, %v729
        %731 = vrot.lane.b32.xlu0 %v730, 72
        %v732 = vpop.permute.xlu0 %731
        %v733 = vrot.slane %v732, 4
        %vm734 = vcmask 588800
        %v735 = vsel %vm734, %v732, %v733
        %737 = vst [vmem:[#allocation3] sm:$0x3] %v735
        %v738 = vld [vmem:[#allocation2] sm:$0xf]
        %v740 = vcombine.low %v738, %v738
        %v742 = vunpack.c.l.s4 1983009808
        %v743 = vunpack.c.0.s8 %v742
        %v744 = vlaneseq
        %v745 = vshrl.u32 %v744, 7
        %v746 = vsub.s32 %v743, %v745
        %v747 = vrot.slane %v740, %v746
        %748 = vrot.lane.b32.xlu0 %v747, 71
        %v749 = vpop.permute.xlu0 %748
        %v750 = vrot.slane %v749, 4
        %vm751 = vcmask 580608
        %v752 = vsel %vm751, %v749, %v750
        %754 = vst [vmem:[#allocation3] sm:$0xc] %v752
        %v755 = vld [vmem:[#allocation2] sm:$0xf]
        %v758 = vunpack.c.l.s4 1983009808
        %v759 = vunpack.c.0.s8 %v758
        %v760 = vlaneseq
        %v761 = vshrl.u32 %v760, 7
        %v762 = vsub.s32 %v759, %v761
        %v763 = vrot.slane %v755, %v762
        %764 = vrot.lane.b32.xlu0 %v763, 70
        %v765 = vpop.permute.xlu0 %764
        %v766 = vrot.slane %v765, 4
        %vm767 = vcmask 572416
        %v768 = vsel %vm767, %v765, %v766
        %770 = vst [vmem:[#allocation3 + $0x4] sm:$0x3] %v768
        %v771 = vld [vmem:[#allocation2] sm:$0xf]
        %v773 = vcombine.low %v771, %v771
        %v775 = vunpack.c.l.s4 1983009808
        %v776 = vunpack.c.0.s8 %v775
        %v777 = vlaneseq
        %v778 = vshrl.u32 %v777, 7
        %v779 = vsub.s32 %v776, %v778
        %v780 = vrot.slane %v773, %v779
        %781 = vrot.lane.b32.xlu0 %v780, 69
        %v782 = vpop.permute.xlu0 %781
        %v783 = vrot.slane %v782, 4
        %vm784 = vcmask 564224
        %v785 = vsel %vm784, %v782, %v783
        %787 = vst [vmem:[#allocation3 + $0x4] sm:$0xc] %v785
        %v788 = vld [vmem:[#allocation2] sm:$0xf]
        %v791 = vunpack.c.l.s4 1983009808
        %v792 = vunpack.c.0.s8 %v791
        %v793 = vlaneseq
        %v794 = vshrl.u32 %v793, 7
        %v795 = vsub.s32 %v792, %v794
        %v796 = vrot.slane %v788, %v795
        %797 = vrot.lane.b32.xlu0 %v796, 68
        %v798 = vpop.permute.xlu0 %797
        %v799 = vrot.slane %v798, 4
        %vm800 = vcmask 556032
        %v801 = vsel %vm800, %v798, %v799
        %803 = vst [vmem:[#allocation3 + $0x8] sm:$0x3] %v801
        %v804 = vld [vmem:[#allocation2] sm:$0xf]
        %v806 = vcombine.low %v804, %v804
        %v808 = vunpack.c.l.s4 1983009808
        %v809 = vunpack.c.0.s8 %v808
        %v810 = vlaneseq
        %v811 = vshrl.u32 %v810, 7
        %v812 = vsub.s32 %v809, %v811
        %v813 = vrot.slane %v806, %v812
        %814 = vrot.lane.b32.xlu0 %v813, 67
        %v815 = vpop.permute.xlu0 %814
        %v816 = vrot.slane %v815, 4
        %vm817 = vcmask 547840
        %v818 = vsel %vm817, %v815, %v816
        %820 = vst [vmem:[#allocation3 + $0x8] sm:$0xc] %v818
        %v821 = vld [vmem:[#allocation2] sm:$0xf]
        %v824 = vunpack.c.l.s4 1983009808
        %v825 = vunpack.c.0.s8 %v824
        %v826 = vlaneseq
        %v827 = vshrl.u32 %v826, 7
        %v828 = vsub.s32 %v825, %v827
        %v829 = vrot.slane %v821, %v828
        %830 = vrot.lane.b32.xlu0 %v829, 66
        %v831 = vpop.permute.xlu0 %830
        %v832 = vrot.slane %v831, 4
        %vm833 = vcmask 539648
        %v834 = vsel %vm833, %v831, %v832
        %836 = vst [vmem:[#allocation3 + $0xc] sm:$0x3] %v834
        %s837 = scalar_lea.vmem [#allocation4], 8
        %v838 = vld [vmem:[%s837] sm:$0xf]
        %v839 = vld [vmem:[#allocation3] sm:$0xf]
        %v840 = vld [vmem:[#allocation3 + $0x4] sm:$0xf]
        %v841 = vld [vmem:[#allocation3 + $0x8] sm:$0xf]
        %v842 = vld [vmem:[#allocation3 + $0xc] sm:$0x3]
        %v847 = vunpack.c.l.b16 %v839
        %v848 = vunpack.c.l.b16 %v840
        %v849 = vunpack.c.l.b16 %v841
        %v850 = vunpack.c.l.b16 %v842
        %v851 = vpack.c.b16 %v848, %v847
        %v852 = vpack.c.b16 %v850, %v849
        %v855 = vsel %vm617, %v838, 0
        %v858 = vsel %vm621, %v852, 0
        %860 = vmatprep.subr.bf16.mxu0 0
        %861 = vmatpush1.bf16.msra.mxu0 0
        %862 = vmatprep.subr.bf16.mxu0 0
        %863 = vmatpush1.bf16.msra.mxu0 0
        %864 = vmatprep.subr.bf16.mxu0 0
        %865 = vmatpush1.bf16.msra.mxu0 0
        %866 = vmatprep.subr.bf16.mxu0 0
        %867 = vmatpush1.bf16.msra.mxu0 0
        %868 = vmatprep.subr.bf16.mxu0 0
        %869 = vmatpush1.bf16.msra.mxu0 0
        %870 = vmatprep.subr.bf16.mxu0 0
        %871 = vmatpush1.bf16.msra.mxu0 0
        %872 = vmatprep.subr.bf16.mxu0 0
        %873 = vmatpush1.bf16.msra.mxu0 %v858
        %874 = vmatprep.subr.bf16.mxu0 0
        %875 = vmatpush1.bf16.msra.mxu0 %v851
        %876 = vmatprep.subr.bf16.mxu0 0
        %877 = vmatpush2.bf16.msra.mxu0 0
        %878 = vmatprep.subr.bf16.mxu0 0
        %879 = vmatpush2.bf16.msra.mxu0 0
        %880 = vmatprep.subr.bf16.mxu0 0
        %881 = vmatpush2.bf16.msra.mxu0 0
        %882 = vmatprep.subr.bf16.mxu0 0
        %883 = vmatpush2.bf16.msra.mxu0 0
        %884 = vmatprep.subr.bf16.mxu0 0
        %885 = vmatpush2.bf16.msra.mxu0 0
        %886 = vmatprep.subr.bf16.mxu0 0
        %887 = vmatpush2.bf16.msra.mxu0 0
        %888 = vmatprep.subr.bf16.mxu0 0
        %889 = vmatpush2.bf16.msra.mxu0 0
        %890 = vmatprep.subr.bf16.mxu0 0
        %891 = vmatpush2.bf16.msra.mxu0 0
        %892 = vmatprep.mubr.bf16.mxu0 0
        %893 = vmatmul.mubr.bf16.gmra.mxu0 %v855
        %v894 = vpop.f32.mrf.mxu0
        %v895 = vadd.f32 0.0, %v894
        %v896 = vpop.f32.mrf.mxu0
        %v897 = vpop.f32.mrf.mxu0
        %v898 = vpop.f32.mrf.mxu0
        %899 = vdwg.mxu0
        %v900 = vadd.f32 %v717, %v895
        %v901 = vld [vmem:[#allocation2] sm:$0xf]
        %v904 = vunpack.c.l.s4 1983009808
        %v905 = vunpack.c.0.s8 %v904
        %v906 = vlaneseq
        %v907 = vshrl.u32 %v906, 7
        %v908 = vsub.s32 %v905, %v907
        %v909 = vrot.slane %v901, %v908
        %910 = vrot.lane.b32.xlu0 %v909, 44
        %v911 = vpop.permute.xlu0 %910
        %v912 = vrot.slane %v911, 4
        %vm913 = vcmask 359424
        %v914 = vsel %vm913, %v911, %v912
        %916 = vst [vmem:[#allocation3] sm:$0x3] %v914
        %v917 = vld [vmem:[#allocation2] sm:$0xf]
        %v919 = vcombine.low %v917, %v917
        %v921 = vunpack.c.l.s4 1983009808
        %v922 = vunpack.c.0.s8 %v921
        %v923 = vlaneseq
        %v924 = vshrl.u32 %v923, 7
        %v925 = vsub.s32 %v922, %v924
        %v926 = vrot.slane %v919, %v925
        %927 = vrot.lane.b32.xlu0 %v926, 43
        %v928 = vpop.permute.xlu0 %927
        %v929 = vrot.slane %v928, 4
        %vm930 = vcmask 351232
        %v931 = vsel %vm930, %v928, %v929
        %933 = vst [vmem:[#allocation3] sm:$0xc] %v931
        %v934 = vld [vmem:[#allocation2] sm:$0xf]
        %v937 = vunpack.c.l.s4 1983009808
        %v938 = vunpack.c.0.s8 %v937
        %v939 = vlaneseq
        %v940 = vshrl.u32 %v939, 7
        %v941 = vsub.s32 %v938, %v940
        %v942 = vrot.slane %v934, %v941
        %943 = vrot.lane.b32.xlu0 %v942, 42
        %v944 = vpop.permute.xlu0 %943
        %v945 = vrot.slane %v944, 4
        %vm946 = vcmask 343040
        %v947 = vsel %vm946, %v944, %v945
        %949 = vst [vmem:[#allocation3 + $0x4] sm:$0x3] %v947
        %v950 = vld [vmem:[#allocation2] sm:$0xf]
        %v952 = vcombine.low %v950, %v950
        %v954 = vunpack.c.l.s4 1983009808
        %v955 = vunpack.c.0.s8 %v954
        %v956 = vlaneseq
        %v957 = vshrl.u32 %v956, 7
        %v958 = vsub.s32 %v955, %v957
        %v959 = vrot.slane %v952, %v958
        %960 = vrot.lane.b32.xlu0 %v959, 41
        %v961 = vpop.permute.xlu0 %960
        %v962 = vrot.slane %v961, 4
        %vm963 = vcmask 334848
        %v964 = vsel %vm963, %v961, %v962
        %966 = vst [vmem:[#allocation3 + $0x4] sm:$0xc] %v964
        %v967 = vld [vmem:[#allocation2] sm:$0xf]
        %v970 = vunpack.c.l.s4 1983009808
        %v971 = vunpack.c.0.s8 %v970
        %v972 = vlaneseq
        %v973 = vshrl.u32 %v972, 7
        %v974 = vsub.s32 %v971, %v973
        %v975 = vrot.slane %v967, %v974
        %976 = vrot.lane.b32.xlu0 %v975, 40
        %v977 = vpop.permute.xlu0 %976
        %v978 = vrot.slane %v977, 4
        %vm979 = vcmask 326656
        %v980 = vsel %vm979, %v977, %v978
        %982 = vst [vmem:[#allocation3 + $0x8] sm:$0x3] %v980
        %v983 = vld [vmem:[#allocation2] sm:$0xf]
        %v985 = vcombine.low %v983, %v983
        %v987 = vunpack.c.l.s4 1983009808
        %v988 = vunpack.c.0.s8 %v987
        %v989 = vlaneseq
        %v990 = vshrl.u32 %v989, 7
        %v991 = vsub.s32 %v988, %v990
        %v992 = vrot.slane %v985, %v991
        %993 = vrot.lane.b32.xlu0 %v992, 39
        %v994 = vpop.permute.xlu0 %993
        %v995 = vrot.slane %v994, 4
        %vm996 = vcmask 318464
        %v997 = vsel %vm996, %v994, %v995
        %999 = vst [vmem:[#allocation3 + $0x8] sm:$0xc] %v997
        %v1000 = vld [vmem:[#allocation2] sm:$0xf]
        %v1003 = vunpack.c.l.s4 1983009808
        %v1004 = vunpack.c.0.s8 %v1003
        %v1005 = vlaneseq
        %v1006 = vshrl.u32 %v1005, 7
        %v1007 = vsub.s32 %v1004, %v1006
        %v1008 = vrot.slane %v1000, %v1007
        %1009 = vrot.lane.b32.xlu0 %v1008, 38
        %v1010 = vpop.permute.xlu0 %1009
        %v1011 = vrot.slane %v1010, 4
        %vm1012 = vcmask 310272
        %v1013 = vsel %vm1012, %v1010, %v1011
        %1015 = vst [vmem:[#allocation3 + $0xc] sm:$0x3] %v1013
        %s1016 = scalar_lea.vmem [#allocation4], 12
        %v1017 = vld [vmem:[%s1016] sm:$0xf]
        %v1018 = vld [vmem:[#allocation3] sm:$0xf]
        %v1019 = vld [vmem:[#allocation3 + $0x4] sm:$0xf]
        %v1020 = vld [vmem:[#allocation3 + $0x8] sm:$0xf]
        %v1021 = vld [vmem:[#allocation3 + $0xc] sm:$0x3]
        %v1026 = vunpack.c.l.b16 %v1018
        %v1027 = vunpack.c.l.b16 %v1019
        %v1028 = vunpack.c.l.b16 %v1020
        %v1029 = vunpack.c.l.b16 %v1021
        %v1030 = vpack.c.b16 %v1027, %v1026
        %v1031 = vpack.c.b16 %v1029, %v1028
        %v1034 = vsel %vm617, %v1017, 0
        %v1037 = vsel %vm621, %v1031, 0
        %1039 = vmatprep.subr.bf16.mxu0 0
        %1040 = vmatpush1.bf16.msra.mxu0 0
        %1041 = vmatprep.subr.bf16.mxu0 0
        %1042 = vmatpush1.bf16.msra.mxu0 0
        %1043 = vmatprep.subr.bf16.mxu0 0
        %1044 = vmatpush1.bf16.msra.mxu0 0
        %1045 = vmatprep.subr.bf16.mxu0 0
        %1046 = vmatpush1.bf16.msra.mxu0 0
        %1047 = vmatprep.subr.bf16.mxu0 0
        %1048 = vmatpush1.bf16.msra.mxu0 0
        %1049 = vmatprep.subr.bf16.mxu0 0
        %1050 = vmatpush1.bf16.msra.mxu0 0
        %1051 = vmatprep.subr.bf16.mxu0 0
        %1052 = vmatpush1.bf16.msra.mxu0 %v1037
        %1053 = vmatprep.subr.bf16.mxu0 0
        %1054 = vmatpush1.bf16.msra.mxu0 %v1030
        %1055 = vmatprep.subr.bf16.mxu0 0
        %1056 = vmatpush2.bf16.msra.mxu0 0
        %1057 = vmatprep.subr.bf16.mxu0 0
        %1058 = vmatpush2.bf16.msra.mxu0 0
        %1059 = vmatprep.subr.bf16.mxu0 0
        %1060 = vmatpush2.bf16.msra.mxu0 0
        %1061 = vmatprep.subr.bf16.mxu0 0
        %1062 = vmatpush2.bf16.msra.mxu0 0
        %1063 = vmatprep.subr.bf16.mxu0 0
        %1064 = vmatpush2.bf16.msra.mxu0 0
        %1065 = vmatprep.subr.bf16.mxu0 0
        %1066 = vmatpush2.bf16.msra.mxu0 0
        %1067 = vmatprep.subr.bf16.mxu0 0
        %1068 = vmatpush2.bf16.msra.mxu0 0
        %1069 = vmatprep.subr.bf16.mxu0 0
        %1070 = vmatpush2.bf16.msra.mxu0 0
        %1071 = vmatprep.mubr.bf16.mxu0 0
        %1072 = vmatmul.mubr.bf16.gmra.mxu0 %v1034
        %v1073 = vpop.f32.mrf.mxu0
        %v1074 = vadd.f32 0.0, %v1073
        %v1075 = vpop.f32.mrf.mxu0
        %v1076 = vpop.f32.mrf.mxu0
        %v1077 = vpop.f32.mrf.mxu0
        %1078 = vdwg.mxu0
        %v1079 = vadd.f32 %v900, %v1074
        %v1080 = vld [vmem:[#allocation2] sm:$0xf]
        %v1083 = vunpack.c.l.s4 1983009808
        %v1084 = vunpack.c.0.s8 %v1083
        %v1085 = vlaneseq
        %v1086 = vshrl.u32 %v1085, 7
        %v1087 = vsub.s32 %v1084, %v1086
        %v1088 = vrot.slane %v1080, %v1087
        %1089 = vrot.lane.b32.xlu0 %v1088, 16
        %v1090 = vpop.permute.xlu0 %1089
        %v1091 = vrot.slane %v1090, 4
        %vm1092 = vcmask 130048
        %v1093 = vsel %vm1092, %v1090, %v1091
        %1095 = vst [vmem:[#allocation3] sm:$0x3] %v1093
        %v1096 = vld [vmem:[#allocation2] sm:$0xf]
        %v1098 = vcombine.low %v1096, %v1096
        %v1100 = vunpack.c.l.s4 1983009808
        %v1101 = vunpack.c.0.s8 %v1100
        %v1102 = vlaneseq
        %v1103 = vshrl.u32 %v1102, 7
        %v1104 = vsub.s32 %v1101, %v1103
        %v1105 = vrot.slane %v1098, %v1104
        %1106 = vrot.lane.b32.xlu0 %v1105, 15
        %v1107 = vpop.permute.xlu0 %1106
        %v1108 = vrot.slane %v1107, 4
        %vm1109 = vcmask 121856
        %v1110 = vsel %vm1109, %v1107, %v1108
        %1112 = vst [vmem:[#allocation3] sm:$0xc] %v1110
        %v1113 = vld [vmem:[#allocation2] sm:$0xf]
        %v1116 = vunpack.c.l.s4 1983009808
        %v1117 = vunpack.c.0.s8 %v1116
        %v1118 = vlaneseq
        %v1119 = vshrl.u32 %v1118, 7
        %v1120 = vsub.s32 %v1117, %v1119
        %v1121 = vrot.slane %v1113, %v1120
        %1122 = vrot.lane.b32.xlu0 %v1121, 14
        %v1123 = vpop.permute.xlu0 %1122
        %v1124 = vrot.slane %v1123, 4
        %vm1125 = vcmask 113664
        %v1126 = vsel %vm1125, %v1123, %v1124
        %1128 = vst [vmem:[#allocation3 + $0x4] sm:$0x3] %v1126
        %v1129 = vld [vmem:[#allocation2] sm:$0xf]
        %v1131 = vcombine.low %v1129, %v1129
        %v1133 = vunpack.c.l.s4 1983009808
        %v1134 = vunpack.c.0.s8 %v1133
        %v1135 = vlaneseq
        %v1136 = vshrl.u32 %v1135, 7
        %v1137 = vsub.s32 %v1134, %v1136
        %v1138 = vrot.slane %v1131, %v1137
        %1139 = vrot.lane.b32.xlu0 %v1138, 13
        %v1140 = vpop.permute.xlu0 %1139
        %v1141 = vrot.slane %v1140, 4
        %vm1142 = vcmask 105472
        %v1143 = vsel %vm1142, %v1140, %v1141
        %1145 = vst [vmem:[#allocation3 + $0x4] sm:$0xc] %v1143
        %v1146 = vld [vmem:[#allocation2] sm:$0xf]
        %v1149 = vunpack.c.l.s4 1983009808
        %v1150 = vunpack.c.0.s8 %v1149
        %v1151 = vlaneseq
        %v1152 = vshrl.u32 %v1151, 7
        %v1153 = vsub.s32 %v1150, %v1152
        %v1154 = vrot.slane %v1146, %v1153
        %1155 = vrot.lane.b32.xlu0 %v1154, 12
        %v1156 = vpop.permute.xlu0 %1155
        %v1157 = vrot.slane %v1156, 4
        %vm1158 = vcmask 97280
        %v1159 = vsel %vm1158, %v1156, %v1157
        %1161 = vst [vmem:[#allocation3 + $0x8] sm:$0x3] %v1159
        %v1162 = vld [vmem:[#allocation2] sm:$0xf]
        %v1164 = vcombine.low %v1162, %v1162
        %v1166 = vunpack.c.l.s4 1983009808
        %v1167 = vunpack.c.0.s8 %v1166
        %v1168 = vlaneseq
        %v1169 = vshrl.u32 %v1168, 7
        %v1170 = vsub.s32 %v1167, %v1169
        %v1171 = vrot.slane %v1164, %v1170
        %1172 = vrot.lane.b32.xlu0 %v1171, 11
        %v1173 = vpop.permute.xlu0 %1172
        %v1174 = vrot.slane %v1173, 4
        %vm1175 = vcmask 89088
        %v1176 = vsel %vm1175, %v1173, %v1174
        %1178 = vst [vmem:[#allocation3 + $0x8] sm:$0xc] %v1176
        %v1179 = vld [vmem:[#allocation2] sm:$0xf]
        %v1182 = vunpack.c.l.s4 1983009808
        %v1183 = vunpack.c.0.s8 %v1182
        %v1184 = vlaneseq
        %v1185 = vshrl.u32 %v1184, 7
        %v1186 = vsub.s32 %v1183, %v1185
        %v1187 = vrot.slane %v1179, %v1186
        %1188 = vrot.lane.b32.xlu0 %v1187, 10
        %v1189 = vpop.permute.xlu0 %1188
        %v1190 = vrot.slane %v1189, 4
        %vm1191 = vcmask 80896
        %v1192 = vsel %vm1191, %v1189, %v1190
        %1194 = vst [vmem:[#allocation3 + $0xc] sm:$0x3] %v1192
        %s1195 = scalar_lea.vmem [#allocation4], 16
        %v1196 = vld [vmem:[%s1195] sm:$0xf]
        %v1197 = vld [vmem:[#allocation3] sm:$0xf]
        %v1198 = vld [vmem:[#allocation3 + $0x4] sm:$0xf]
        %v1199 = vld [vmem:[#allocation3 + $0x8] sm:$0xf]
        %v1200 = vld [vmem:[#allocation3 + $0xc] sm:$0x3]
        %v1205 = vunpack.c.l.b16 %v1197
        %v1206 = vunpack.c.l.b16 %v1198
        %v1207 = vunpack.c.l.b16 %v1199
        %v1208 = vunpack.c.l.b16 %v1200
        %v1209 = vpack.c.b16 %v1206, %v1205
        %v1210 = vpack.c.b16 %v1208, %v1207
        %v1213 = vsel %vm617, %v1196, 0
        %v1216 = vsel %vm621, %v1210, 0
        %1218 = vmatprep.subr.bf16.mxu0 0
        %1219 = vmatpush1.bf16.msra.mxu0 0
        %1220 = vmatprep.subr.bf16.mxu0 0
        %1221 = vmatpush1.bf16.msra.mxu0 0
        %1222 = vmatprep.subr.bf16.mxu0 0
        %1223 = vmatpush1.bf16.msra.mxu0 0
        %1224 = vmatprep.subr.bf16.mxu0 0
        %1225 = vmatpush1.bf16.msra.mxu0 0
        %1226 = vmatprep.subr.bf16.mxu0 0
        %1227 = vmatpush1.bf16.msra.mxu0 0
        %1228 = vmatprep.subr.bf16.mxu0 0
        %1229 = vmatpush1.bf16.msra.mxu0 0
        %1230 = vmatprep.subr.bf16.mxu0 0
        %1231 = vmatpush1.bf16.msra.mxu0 %v1216
        %1232 = vmatprep.subr.bf16.mxu0 0
        %1233 = vmatpush1.bf16.msra.mxu0 %v1209
        %1234 = vmatprep.subr.bf16.mxu0 0
        %1235 = vmatpush2.bf16.msra.mxu0 0
        %1236 = vmatprep.subr.bf16.mxu0 0
        %1237 = vmatpush2.bf16.msra.mxu0 0
        %1238 = vmatprep.subr.bf16.mxu0 0
        %1239 = vmatpush2.bf16.msra.mxu0 0
        %1240 = vmatprep.subr.bf16.mxu0 0
        %1241 = vmatpush2.bf16.msra.mxu0 0
        %1242 = vmatprep.subr.bf16.mxu0 0
        %1243 = vmatpush2.bf16.msra.mxu0 0
        %1244 = vmatprep.subr.bf16.mxu0 0
        %1245 = vmatpush2.bf16.msra.mxu0 0
        %1246 = vmatprep.subr.bf16.mxu0 0
        %1247 = vmatpush2.bf16.msra.mxu0 0
        %1248 = vmatprep.subr.bf16.mxu0 0
        %1249 = vmatpush2.bf16.msra.mxu0 0
        %1250 = vmatprep.mubr.bf16.mxu0 0
        %1251 = vmatmul.mubr.bf16.gmra.mxu0 %v1213
        %v1252 = vpop.f32.mrf.mxu0
        %v1253 = vadd.f32 0.0, %v1252
        %v1254 = vpop.f32.mrf.mxu0
        %v1255 = vpop.f32.mrf.mxu0
        %v1256 = vpop.f32.mrf.mxu0
        %1257 = vdwg.mxu0
        %v1258 = vadd.f32 %v1079, %v1253
        %v1259 = vld [vmem:[#allocation2 + $0x2] sm:$0xf]
        %v1262 = vunpack.c.l.s4 1983009808
        %v1263 = vunpack.c.0.s8 %v1262
        %v1264 = vlaneseq
        %v1265 = vshrl.u32 %v1264, 7
        %v1266 = vsub.s32 %v1263, %v1265
        %v1267 = vrot.slane %v1259, %v1266
        %1268 = vrot.lane.b32.xlu0 %v1267, 116
        %v1269 = vpop.permute.xlu0 %1268
        %v1270 = vrot.slane %v1269, 4
        %vm1271 = vcmask 949248
        %v1272 = vsel %vm1271, %v1269, %v1270
        %1274 = vst [vmem:[#allocation3] sm:$0x3] %v1272
        %v1275 = vld [vmem:[#allocation2 + $0x2] sm:$0xf]
        %v1277 = vcombine.low %v1275, %v1275
        %v1279 = vunpack.c.l.s4 1983009808
        %v1280 = vunpack.c.0.s8 %v1279
        %v1281 = vlaneseq
        %v1282 = vshrl.u32 %v1281, 7
        %v1283 = vsub.s32 %v1280, %v1282
        %v1284 = vrot.slane %v1277, %v1283
        %1285 = vrot.lane.b32.xlu0 %v1284, 115
        %v1286 = vpop.permute.xlu0 %1285
        %v1287 = vrot.slane %v1286, 4
        %vm1288 = vcmask 941056
        %v1289 = vsel %vm1288, %v1286, %v1287
        %1291 = vst [vmem:[#allocation3] sm:$0xc] %v1289
        %v1292 = vld [vmem:[#allocation2 + $0x2] sm:$0xf]
        %v1295 = vunpack.c.l.s4 1983009808
        %v1296 = vunpack.c.0.s8 %v1295
        %v1297 = vlaneseq
        %v1298 = vshrl.u32 %v1297, 7
        %v1299 = vsub.s32 %v1296, %v1298
        %v1300 = vrot.slane %v1292, %v1299
        %1301 = vrot.lane.b32.xlu0 %v1300, 114
        %v1302 = vpop.permute.xlu0 %1301
        %v1303 = vrot.slane %v1302, 4
        %vm1304 = vcmask 932864
        %v1305 = vsel %vm1304, %v1302, %v1303
        %1307 = vst [vmem:[#allocation3 + $0x4] sm:$0x3] %v1305
        %v1308 = vld [vmem:[#allocation2 + $0x2] sm:$0xf]
        %v1310 = vcombine.low %v1308, %v1308
        %v1312 = vunpack.c.l.s4 1983009808
        %v1313 = vunpack.c.0.s8 %v1312
        %v1314 = vlaneseq
        %v1315 = vshrl.u32 %v1314, 7
        %v1316 = vsub.s32 %v1313, %v1315
        %v1317 = vrot.slane %v1310, %v1316
        %1318 = vrot.lane.b32.xlu0 %v1317, 113
        %v1319 = vpop.permute.xlu0 %1318
        %v1320 = vrot.slane %v1319, 4
        %vm1321 = vcmask 924672
        %v1322 = vsel %vm1321, %v1319, %v1320
        %1324 = vst [vmem:[#allocation3 + $0x4] sm:$0xc] %v1322
        %v1325 = vld [vmem:[#allocation2 + $0x2] sm:$0xf]
        %v1328 = vunpack.c.l.s4 1983009808
        %v1329 = vunpack.c.0.s8 %v1328
        %v1330 = vlaneseq
        %v1331 = vshrl.u32 %v1330, 7
        %v1332 = vsub.s32 %v1329, %v1331
        %v1333 = vrot.slane %v1325, %v1332
        %1334 = vrot.lane.b32.xlu0 %v1333, 112
        %v1335 = vpop.permute.xlu0 %1334
        %v1336 = vrot.slane %v1335, 4
        %vm1337 = vcmask 916480
        %v1338 = vsel %vm1337, %v1335, %v1336
        %1340 = vst [vmem:[#allocation3 + $0x8] sm:$0x3] %v1338
        %v1341 = vld [vmem:[#allocation2 + $0x2] sm:$0xf]
        %v1343 = vcombine.low %v1341, %v1341
        %v1345 = vunpack.c.l.s4 1983009808
        %v1346 = vunpack.c.0.s8 %v1345
        %v1347 = vlaneseq
        %v1348 = vshrl.u32 %v1347, 7
        %v1349 = vsub.s32 %v1346, %v1348
        %v1350 = vrot.slane %v1343, %v1349
        %1351 = vrot.lane.b32.xlu0 %v1350, 111
        %v1352 = vpop.permute.xlu0 %1351
        %v1353 = vrot.slane %v1352, 4
        %vm1354 = vcmask 908288
        %v1355 = vsel %vm1354, %v1352, %v1353
        %1357 = vst [vmem:[#allocation3 + $0x8] sm:$0xc] %v1355
        %v1358 = vld [vmem:[#allocation2 + $0x2] sm:$0xf]
        %v1361 = vunpack.c.l.s4 1983009808
        %v1362 = vunpack.c.0.s8 %v1361
        %v1363 = vlaneseq
        %v1364 = vshrl.u32 %v1363, 7
        %v1365 = vsub.s32 %v1362, %v1364
        %v1366 = vrot.slane %v1358, %v1365
        %1367 = vrot.lane.b32.xlu0 %v1366, 110
        %v1368 = vpop.permute.xlu0 %1367
        %v1369 = vrot.slane %v1368, 4
        %vm1370 = vcmask 900096
        %v1371 = vsel %vm1370, %v1368, %v1369
        %1373 = vst [vmem:[#allocation3 + $0xc] sm:$0x3] %v1371
        %s1374 = scalar_lea.vmem [#allocation4], 20
        %v1375 = vld [vmem:[%s1374] sm:$0xf]
        %v1376 = vld [vmem:[#allocation3] sm:$0xf]
        %v1377 = vld [vmem:[#allocation3 + $0x4] sm:$0xf]
        %v1378 = vld [vmem:[#allocation3 + $0x8] sm:$0xf]
        %v1379 = vld [vmem:[#allocation3 + $0xc] sm:$0x3]
        %v1384 = vunpack.c.l.b16 %v1376
        %v1385 = vunpack.c.l.b16 %v1377
        %v1386 = vunpack.c.l.b16 %v1378
        %v1387 = vunpack.c.l.b16 %v1379
        %v1388 = vpack.c.b16 %v1385, %v1384
        %v1389 = vpack.c.b16 %v1387, %v1386
        %v1392 = vsel %vm617, %v1375, 0
        %v1395 = vsel %vm621, %v1389, 0
        %1397 = vmatprep.subr.bf16.mxu0 0
        %1398 = vmatpush1.bf16.msra.mxu0 0
        %1399 = vmatprep.subr.bf16.mxu0 0
        %1400 = vmatpush1.bf16.msra.mxu0 0
        %1401 = vmatprep.subr.bf16.mxu0 0
        %1402 = vmatpush1.bf16.msra.mxu0 0
        %1403 = vmatprep.subr.bf16.mxu0 0
        %1404 = vmatpush1.bf16.msra.mxu0 0
        %1405 = vmatprep.subr.bf16.mxu0 0
        %1406 = vmatpush1.bf16.msra.mxu0 0
        %1407 = vmatprep.subr.bf16.mxu0 0
        %1408 = vmatpush1.bf16.msra.mxu0 0
        %1409 = vmatprep.subr.bf16.mxu0 0
        %1410 = vmatpush1.bf16.msra.mxu0 %v1395
        %1411 = vmatprep.subr.bf16.mxu0 0
        %1412 = vmatpush1.bf16.msra.mxu0 %v1388
        %1413 = vmatprep.subr.bf16.mxu0 0
        %1414 = vmatpush2.bf16.msra.mxu0 0
        %1415 = vmatprep.subr.bf16.mxu0 0
        %1416 = vmatpush2.bf16.msra.mxu0 0
        %1417 = vmatprep.subr.bf16.mxu0 0
        %1418 = vmatpush2.bf16.msra.mxu0 0
        %1419 = vmatprep.subr.bf16.mxu0 0
        %1420 = vmatpush2.bf16.msra.mxu0 0
        %1421 = vmatprep.subr.bf16.mxu0 0
        %1422 = vmatpush2.bf16.msra.mxu0 0
        %1423 = vmatprep.subr.bf16.mxu0 0
        %1424 = vmatpush2.bf16.msra.mxu0 0
        %1425 = vmatprep.subr.bf16.mxu0 0
        %1426 = vmatpush2.bf16.msra.mxu0 0
        %1427 = vmatprep.subr.bf16.mxu0 0
        %1428 = vmatpush2.bf16.msra.mxu0 0
        %1429 = vmatprep.mubr.bf16.mxu0 0
        %1430 = vmatmul.mubr.bf16.gmra.mxu0 %v1392
        %v1431 = vpop.f32.mrf.mxu0
        %v1432 = vadd.f32 0.0, %v1431
        %v1433 = vpop.f32.mrf.mxu0
        %v1434 = vpop.f32.mrf.mxu0
        %v1435 = vpop.f32.mrf.mxu0
        %1436 = vdwg.mxu0
        %v1437 = vadd.f32 %v1258, %v1432
        %v1438 = vld [vmem:[#allocation2 + $0x2] sm:$0xf]
        %v1441 = vunpack.c.l.s4 1983009808
        %v1442 = vunpack.c.0.s8 %v1441
        %v1443 = vlaneseq
        %v1444 = vshrl.u32 %v1443, 7
        %v1445 = vsub.s32 %v1442, %v1444
        %v1446 = vrot.slane %v1438, %v1445
        %1447 = vrot.lane.b32.xlu0 %v1446, 88
        %v1448 = vpop.permute.xlu0 %1447
        %v1449 = vrot.slane %v1448, 4
        %vm1450 = vcmask 719872
        %v1451 = vsel %vm1450, %v1448, %v1449
        %1453 = vst [vmem:[#allocation3] sm:$0x3] %v1451
        %v1454 = vld [vmem:[#allocation2 + $0x2] sm:$0xf]
        %v1456 = vcombine.low %v1454, %v1454
        %v1458 = vunpack.c.l.s4 1983009808
        %v1459 = vunpack.c.0.s8 %v1458
        %v1460 = vlaneseq
        %v1461 = vshrl.u32 %v1460, 7
        %v1462 = vsub.s32 %v1459, %v1461
        %v1463 = vrot.slane %v1456, %v1462
        %1464 = vrot.lane.b32.xlu0 %v1463, 87
        %v1465 = vpop.permute.xlu0 %1464
        %v1466 = vrot.slane %v1465, 4
        %vm1467 = vcmask 711680
        %v1468 = vsel %vm1467, %v1465, %v1466
        %1470 = vst [vmem:[#allocation3] sm:$0xc] %v1468
        %v1471 = vld [vmem:[#allocation2 + $0x2] sm:$0xf]
        %v1474 = vunpack.c.l.s4 1983009808
        %v1475 = vunpack.c.0.s8 %v1474
        %v1476 = vlaneseq
        %v1477 = vshrl.u32 %v1476, 7
        %v1478 = vsub.s32 %v1475, %v1477
        %v1479 = vrot.slane %v1471, %v1478
        %1480 = vrot.lane.b32.xlu0 %v1479, 86
        %v1481 = vpop.permute.xlu0 %1480
        %v1482 = vrot.slane %v1481, 4
        %vm1483 = vcmask 703488
        %v1484 = vsel %vm1483, %v1481, %v1482
        %1486 = vst [vmem:[#allocation3 + $0x4] sm:$0x3] %v1484
        %v1487 = vld [vmem:[#allocation2 + $0x2] sm:$0xf]
        %v1489 = vcombine.low %v1487, %v1487
        %v1491 = vunpack.c.l.s4 1983009808
        %v1492 = vunpack.c.0.s8 %v1491
        %v1493 = vlaneseq
        %v1494 = vshrl.u32 %v1493, 7
        %v1495 = vsub.s32 %v1492, %v1494
        %v1496 = vrot.slane %v1489, %v1495
        %1497 = vrot.lane.b32.xlu0 %v1496, 85
        %v1498 = vpop.permute.xlu0 %1497
        %v1499 = vrot.slane %v1498, 4
        %vm1500 = vcmask 695296
        %v1501 = vsel %vm1500, %v1498, %v1499
        %1503 = vst [vmem:[#allocation3 + $0x4] sm:$0xc] %v1501
        %v1504 = vld [vmem:[#allocation2 + $0x2] sm:$0xf]
        %v1507 = vunpack.c.l.s4 1983009808
        %v1508 = vunpack.c.0.s8 %v1507
        %v1509 = vlaneseq
        %v1510 = vshrl.u32 %v1509, 7
        %v1511 = vsub.s32 %v1508, %v1510
        %v1512 = vrot.slane %v1504, %v1511
        %1513 = vrot.lane.b32.xlu0 %v1512, 84
        %v1514 = vpop.permute.xlu0 %1513
        %v1515 = vrot.slane %v1514, 4
        %vm1516 = vcmask 687104
        %v1517 = vsel %vm1516, %v1514, %v1515
        %1519 = vst [vmem:[#allocation3 + $0x8] sm:$0x3] %v1517
        %v1520 = vld [vmem:[#allocation2 + $0x2] sm:$0xf]
        %v1522 = vcombine.low %v1520, %v1520
        %v1524 = vunpack.c.l.s4 1983009808
        %v1525 = vunpack.c.0.s8 %v1524
        %v1526 = vlaneseq
        %v1527 = vshrl.u32 %v1526, 7
        %v1528 = vsub.s32 %v1525, %v1527
        %v1529 = vrot.slane %v1522, %v1528
        %1530 = vrot.lane.b32.xlu0 %v1529, 83
        %v1531 = vpop.permute.xlu0 %1530
        %v1532 = vrot.slane %v1531, 4
        %vm1533 = vcmask 678912
        %v1534 = vsel %vm1533, %v1531, %v1532
        %1536 = vst [vmem:[#allocation3 + $0x8] sm:$0xc] %v1534
        %v1537 = vld [vmem:[#allocation2 + $0x2] sm:$0xf]
        %v1540 = vunpack.c.l.s4 1983009808
        %v1541 = vunpack.c.0.s8 %v1540
        %v1542 = vlaneseq
        %v1543 = vshrl.u32 %v1542, 7
        %v1544 = vsub.s32 %v1541, %v1543
        %v1545 = vrot.slane %v1537, %v1544
        %1546 = vrot.lane.b32.xlu0 %v1545, 82
        %v1547 = vpop.permute.xlu0 %1546
        %v1548 = vrot.slane %v1547, 4
        %vm1549 = vcmask 670720
        %v1550 = vsel %vm1549, %v1547, %v1548
        %1552 = vst [vmem:[#allocation3 + $0xc] sm:$0x3] %v1550
        %s1553 = scalar_lea.vmem [#allocation4], 24
        %v1554 = vld [vmem:[%s1553] sm:$0xf]
        %v1555 = vld [vmem:[#allocation3] sm:$0xf]
        %v1556 = vld [vmem:[#allocation3 + $0x4] sm:$0xf]
        %v1557 = vld [vmem:[#allocation3 + $0x8] sm:$0xf]
        %v1558 = vld [vmem:[#allocation3 + $0xc] sm:$0x3]
        %v1563 = vunpack.c.l.b16 %v1555
        %v1564 = vunpack.c.l.b16 %v1556
        %v1565 = vunpack.c.l.b16 %v1557
        %v1566 = vunpack.c.l.b16 %v1558
        %v1567 = vpack.c.b16 %v1564, %v1563
        %v1568 = vpack.c.b16 %v1566, %v1565
        %v1571 = vsel %vm617, %v1554, 0
        %v1574 = vsel %vm621, %v1568, 0
        %1576 = vmatprep.subr.bf16.mxu0 0
        %1577 = vmatpush1.bf16.msra.mxu0 0
        %1578 = vmatprep.subr.bf16.mxu0 0
        %1579 = vmatpush1.bf16.msra.mxu0 0
        %1580 = vmatprep.subr.bf16.mxu0 0
        %1581 = vmatpush1.bf16.msra.mxu0 0
        %1582 = vmatprep.subr.bf16.mxu0 0
        %1583 = vmatpush1.bf16.msra.mxu0 0
        %1584 = vmatprep.subr.bf16.mxu0 0
        %1585 = vmatpush1.bf16.msra.mxu0 0
        %1586 = vmatprep.subr.bf16.mxu0 0
        %1587 = vmatpush1.bf16.msra.mxu0 0
        %1588 = vmatprep.subr.bf16.mxu0 0
        %1589 = vmatpush1.bf16.msra.mxu0 %v1574
        %1590 = vmatprep.subr.bf16.mxu0 0
        %1591 = vmatpush1.bf16.msra.mxu0 %v1567
        %1592 = vmatprep.subr.bf16.mxu0 0
        %1593 = vmatpush2.bf16.msra.mxu0 0
        %1594 = vmatprep.subr.bf16.mxu0 0
        %1595 = vmatpush2.bf16.msra.mxu0 0
        %1596 = vmatprep.subr.bf16.mxu0 0
        %1597 = vmatpush2.bf16.msra.mxu0 0
        %1598 = vmatprep.subr.bf16.mxu0 0
        %1599 = vmatpush2.bf16.msra.mxu0 0
        %1600 = vmatprep.subr.bf16.mxu0 0
        %1601 = vmatpush2.bf16.msra.mxu0 0
        %1602 = vmatprep.subr.bf16.mxu0 0
        %1603 = vmatpush2.bf16.msra.mxu0 0
        %1604 = vmatprep.subr.bf16.mxu0 0
        %1605 = vmatpush2.bf16.msra.mxu0 0
        %1606 = vmatprep.subr.bf16.mxu0 0
        %1607 = vmatpush2.bf16.msra.mxu0 0
        %1608 = vmatprep.mubr.bf16.mxu0 0
        %1609 = vmatmul.mubr.bf16.gmra.mxu0 %v1571
        %v1610 = vpop.f32.mrf.mxu0
        %v1611 = vadd.f32 0.0, %v1610
        %v1612 = vpop.f32.mrf.mxu0
        %v1613 = vpop.f32.mrf.mxu0
        %v1614 = vpop.f32.mrf.mxu0
        %1615 = vdwg.mxu0
        %v1616 = vadd.f32 %v1437, %v1611
        %v1617 = vld [vmem:[%s369] sm:$0xff]
        %1619 = vset.pattern.permute.xlu0 0
        %1620 = vperm.xlu0 %1619, %v1617
        %v1621 = vpop.permute.xlu0 %1620
        %v1623 = vadd.f32 %v1616, %v1621
        %v1624 = vmax.f32 %v1623, 0.0
        %1625 = vst [vmem:[%s365] sm:$0xff] %v1624
        %s1626 = sand.u32 %s182, 1
        %s1627 = scalar_lea.sflag [#allocation6], %s1626
        %s1628 = sand.u32 %s182, 1
        %s1629 = smul.addr %s1628, 8
        %s1630 = scalar_lea.vmem [#allocation12], %s1629
        // Predicated region
        $region57: #{tpu_custom_call.1} parent=39 // pred_check
          %p1631 = pneg %p192
        $region58: #{tpu_custom_call.1} parent=39 // pred_check_branch
          %1633 = sbr.rel (%p1631) target = $region60
        $region59: #{tpu_custom_call.1} parent=39 // pred_region
          %s1635 = ssub.s32 128, 128
          %1636 = vsyncadd %s1627, %s1635
          %s1637 = smul.addr %s30, 13
          %s1638 = sadd.s32 %s31, %s1637
          %s1639 = smul.addr %s1638, 128
          %s1640 = scalar_lea.hbm %s5, %s1639
          %s1642 = sshll.u32 %s1630, 4
          %s1643 = int_to_ptr.vmem [resolvable:$true] %s1642
          %1645 = dma.vmem_to_hbm [thread:$0]  %s1643, 128, %s1640, %s1627
        $region60: #{tpu_custom_call.1} parent=39 // pred_fallthru
          _
      $region40: #{tpu_custom_call.1} parent=5 // pred_fallthru
        _
      %p1646 = scmp.le.s32.totalorder 2, %s21
      // Predicated region
      $region61: #{tpu_custom_call.1} parent=5 // pred_check
        %p1647 = pneg %p1646
      $region62: #{tpu_custom_call.1} parent=5 // pred_check_branch
        %1649 = sbr.rel (%p1647) target = $region64
      $region63: #{tpu_custom_call.1} parent=5 // pred_region
        %s1650 = ssub.s32 %s21, 2
        // Predicated region
        $region65: #{tpu_custom_call.1} parent=63 // pred_check
          %p1651 = pneg %p198
        $region66: #{tpu_custom_call.1} parent=63 // pred_check_branch
          %1653 = sbr.rel (%p1651) target = $region68
        $region67: #{tpu_custom_call.1} parent=63 // pred_region
          %s1654 = sand.u32 %s183, 1
          %s1655 = scalar_lea.sflag [#allocation6], %s1654
          %s1656 = sand.u32 %s183, 1
          %s1657 = smul.addr %s1656, 8
          %s1658 = scalar_lea.vmem [#allocation12], %s1657
          %1659 = dma.done %s1655, 128
        $region68: #{tpu_custom_call.1} parent=63 // pred_fallthru
          _
      $region64: #{tpu_custom_call.1} parent=5 // pred_fallthru
        _
    $region6: #{tpu_custom_call.1} parent=1 // loop_footer
      %s25 = sadd.s32 1, %s21
    $region7: #{tpu_custom_call.1} parent=1 // loop_footer_branch
      %20 = sbr.rel target = $region3
    $region8: #{tpu_custom_call.1} parent=1 // loop_exit
      _
    %1660 = vsyncpa [#allocation5], 1
    %s1661 = scalar_lea.sflag [#allocation5], 1
    %1662 = vsyncpa %s1661, 1
    %1663 = vsyncpa [#allocation8], 1
    %s1664 = scalar_lea.sflag [#allocation8], 1
    %1665 = vsyncpa %s1664, 1
    %1666 = vsyncpa [#allocation11], 1
    %s1667 = scalar_lea.sflag [#allocation11], 1
    %1668 = vsyncpa %s1667, 1
    %1669 = vsyncpa [#allocation6], 1
    %s1670 = scalar_lea.sflag [#allocation6], 1
    %1671 = vsyncpa %s1670, 1

</llo_original>
